<compile_context>
chip_gen: v5e
topology: v5e:2x2
jax: 0.10.0
libtpu: 0.0.40
codegen_flags: <defaults>
</compile_context>

<pallas_src>
import jax
import jax.numpy as jnp
import numpy as np
from jax.experimental import pallas as pl
from jax.experimental.pallas import tpu as pltpu


def _round_up(x, m):
    return (x + m - 1) // m * m


def lstm_head_kernel(x_ref, mask_ref, wih_ref, whh_ref, b_ref, wlr_ref, blr_ref,
                     out_ref, gx_scr):
    """One batch tile: LSTM recurrence + masked mean-pool + Linear(H,1) + sigmoid.

    x_ref   : (T, TB, E)    embedded inputs (time-major), matmul dtype
    mask_ref: (T, TB, Hp)   precomputed (t < len[b]) / T  (mask and 1/T folded)
    wih_ref : (E, 4*Hp)     input->gate weights (per-gate H padded to Hp)
    whh_ref : (Hp, 4*Hp)    hidden->gate weights (padded)
    b_ref   : (1, 4*Hp)     b_ih + b_hh (padded)
    wlr_ref : (1, Hp)       logistic-regression weight row (padded)
    blr_ref : (1, 1)        logistic-regression bias
    out_ref : (TB, 1)       sigmoid output
    gx_scr  : (T*TB, 4*Hp)  f32 scratch: precomputed input projection
    """
    T, TB, E = x_ref.shape
    Hp = wlr_ref.shape[1]

    # ---- Prologue: input projection hoisted out of the recurrence ----------
    # One large MXU matmul + a single bias broadcast instead of T tiny matmuls
    # and T bias broadcasts on the serially-dependent path.
    x2d = x_ref[...].reshape(T * TB, E)
    gx_scr[...] = (jnp.dot(x2d, wih_ref[...], preferred_element_type=jnp.float32)
                   + b_ref[...])

    h = jnp.zeros((TB, Hp), jnp.float32)
    c = jnp.zeros((TB, Hp), jnp.float32)
    acc = jnp.zeros((TB, Hp), jnp.float32)

    # ---- Recurrence: fully unrolled (static small T), equivalent to
    # lax.fori_loop(..., unroll=True). Concrete t keeps every slice static and
    # tile-aligned; h/c/acc are single (8,128) vregs carried in registers.
    for t in range(T):
        gx_t = gx_scr[t * TB:(t + 1) * TB, :]                       # (TB, 4Hp)
        gates = gx_t + jnp.dot(h.astype(whh_ref.dtype), whh_ref[...],
                               preferred_element_type=jnp.float32)
        # Each gate slice is a full 128-lane tile (H padded to Hp): no lane
        # shuffles on the critical path. PyTorch gate order [i, f, g, o].
        i_g = jax.nn.sigmoid(gates[:, 0 * Hp:1 * Hp])
        f_g = jax.nn.sigmoid(gates[:, 1 * Hp:2 * Hp])
        g_g = jnp.tanh(gates[:, 2 * Hp:3 * Hp])
        o_g = jax.nn.sigmoid(gates[:, 3 * Hp:4 * Hp])
        c = f_g * c + i_g * g_g
        h = o_g * jnp.tanh(c)
        # packed-sequence zeroing + torch.mean's divide-by-padded-T, both folded
        # into the precomputed mask -> one fused multiply-add per step.
        acc = acc + mask_ref[t] * h

    # ---- Head: Linear(H,1) as a lane reduction (avoids an N=1 MXU pass) ----
    logit = jnp.sum(acc * wlr_ref[...], axis=-1, keepdims=True) + blr_ref[...]
    out_ref[...] = jax.nn.sigmoid(logit)


def lstm_forward(x_emb_bte, lengths, w_ih, w_hh, b_ih, b_hh, w_lr, b_lr, *,
                 matmul_dtype=jnp.float32, batch_tile=8):
    """Pads/re-lays-out parameters and activations, then calls the Pallas kernel.

    Weights are given in PyTorch layout: w_ih (4H, E), w_hh (4H, H),
    b_ih/b_hh (4H,), w_lr (1, H), b_lr (1,). Returns (B, 1) f32.
    """
    B, T, E = x_emb_bte.shape
    H = w_hh.shape[1]

    Hp = _round_up(H, 128)               # lane-tile padded hidden size
    Bp = _round_up(max(B, batch_tile), batch_tile)   # sublane-padded batch

    # ---- parameter re-layout: transpose + per-gate lane padding -------------
    def pad_gate_cols(w_t):              # (rows, 4H) -> (rows, 4Hp)
        rows = w_t.shape[0]
        w4 = w_t.reshape(rows, 4, H)
        w4 = jnp.pad(w4, ((0, 0), (0, 0), (0, Hp - H)))
        return w4.reshape(rows, 4 * Hp)

    wih_p = pad_gate_cols(w_ih.T.astype(jnp.float32))                  # (E, 4Hp)
    whh_t = jnp.pad(w_hh.T.astype(jnp.float32), ((0, Hp - H), (0, 0)))  # (Hp, 4H)
    whh_p = pad_gate_cols(whh_t)                                        # (Hp, 4Hp)
    bias_p = pad_gate_cols((b_ih + b_hh).astype(jnp.float32).reshape(1, 4 * H))
    wlr_p = jnp.pad(w_lr.astype(jnp.float32), ((0, 0), (0, Hp - H)))    # (1, Hp)
    blr_p = b_lr.astype(jnp.float32).reshape(1, 1)                      # (1, 1)

    # ---- activations: pad batch to sublane tile, time-major -----------------
    x_p = jnp.pad(x_emb_bte.astype(jnp.float32), ((0, Bp - B), (0, 0), (0, 0)))
    x_tbe = jnp.transpose(x_p, (1, 0, 2)).astype(matmul_dtype)          # (T, Bp, E)

    len_p = jnp.pad(lengths.astype(jnp.int32), (0, Bp - B))             # (Bp,)
    # Hoisted per-step mask: (t < len[b]) / T  (T = padded length, matching
    # torch.mean(out, 1) on the pad_packed_sequence output).
    mask = (jnp.arange(T, dtype=jnp.int32)[:, None] < len_p[None, :])
    mask = (mask.astype(jnp.float32) / jnp.float32(T))[:, :, None]
    mask = jnp.broadcast_to(mask, (T, Bp, Hp)).astype(jnp.float32)      # (T, Bp, Hp)

    # MXU operand dtype (bf16 recommended on v6e/v7x); accum/elementwise stay f32.
    wih_p = wih_p.astype(matmul_dtype)
    whh_p = whh_p.astype(matmul_dtype)

    nb = Bp // batch_tile
    nbytes = lambda a: int(a.size * a.dtype.itemsize)
    cost = pl.CostEstimate(
        flops=int(2 * T * Bp * (E + Hp) * 4 * Hp),
        transcendentals=int(5 * T * Bp * Hp + Bp),
        bytes_accessed=sum(map(nbytes, (x_tbe, mask, wih_p, whh_p, bias_p,
                                        wlr_p, blr_p))) + Bp * 4,
    )

    out = pl.pallas_call(
        lstm_head_kernel,
        out_shape=jax.ShapeDtypeStruct((Bp, 1), jnp.float32),
        grid_spec=pltpu.PrefetchScalarGridSpec(
            num_scalar_prefetch=0,
            grid=(nb,),                                      # batch tiles
            in_specs=[
                pl.BlockSpec((T, batch_tile, E), lambda i: (0, i, 0)),
                pl.BlockSpec((T, batch_tile, Hp), lambda i: (0, i, 0)),
                pl.BlockSpec((E, 4 * Hp), lambda i: (0, 0)),
                pl.BlockSpec((Hp, 4 * Hp), lambda i: (0, 0)),
                pl.BlockSpec((1, 4 * Hp), lambda i: (0, 0)),
                pl.BlockSpec((1, Hp), lambda i: (0, 0)),
                pl.BlockSpec((1, 1), lambda i: (0, 0)),
            ],
            out_specs=pl.BlockSpec((batch_tile, 1), lambda i: (i, 0)),
            scratch_shapes=[
                pltpu.VMEM((T * batch_tile, 4 * Hp), jnp.float32),  # gates_x
            ],
        ),
        compiler_params=pltpu.CompilerParams(
            dimension_semantics=("parallel",)),              # shards batch tiles
        cost_estimate=cost,
    )(x_tbe, mask, wih_p, whh_p, bias_p, wlr_p, blr_p)
    # TODO(synk): for very long sequences the per-tile (T*tb, 4Hp) gates_x scratch
    # should be streamed over a time-block grid axis (v7x has only 64 MiB VMEM).
    return out[:B]


def reference_forward(x_emb_bte, lengths, w_ih, w_hh, b_ih, b_hh, w_lr, b_lr):
    """Pure-JAX f32 reference of the same math (correctness check)."""
    B, T, E = x_emb_bte.shape
    H = w_hh.shape[1]
    w_ih_t, w_hh_t = w_ih.T, w_hh.T
    bias = (b_ih + b_hh)[None, :]
    h = jnp.zeros((B, H), jnp.float32)
    c = jnp.zeros((B, H), jnp.float32)
    acc = jnp.zeros((B, H), jnp.float32)
    for t in range(T):
        gates = x_emb_bte[:, t, :] @ w_ih_t + h @ w_hh_t + bias
        i_g = jax.nn.sigmoid(gates[:, 0 * H:1 * H])
        f_g = jax.nn.sigmoid(gates[:, 1 * H:2 * H])
        g_g = jnp.tanh(gates[:, 2 * H:3 * H])
        o_g = jax.nn.sigmoid(gates[:, 3 * H:4 * H])
        c = f_g * c + i_g * g_g
        h = o_g * jnp.tanh(c)
        mask = (lengths > t).astype(jnp.float32)[:, None]
        acc = acc + mask * h
    feature = acc / T
    return jax.nn.sigmoid(feature @ w_lr.T + b_lr[None, :])


if __name__ == "__main__":
    key = jax.random.PRNGKey(0)
    ks = jax.random.split(key, 8)

    vocab, emb_dim, hidden_dim = 50, 32, 32
    B, T = 2, 8

    # Parameters (deterministic synthetic init, PyTorch-compatible shapes)
    embedding_matrix = jax.random.normal(ks[0], (vocab, emb_dim), jnp.float32) * 0.1
    w_ih = jax.random.normal(ks[1], (4 * hidden_dim, emb_dim), jnp.float32) * 0.1
    w_hh = jax.random.normal(ks[2], (4 * hidden_dim, hidden_dim), jnp.float32) * 0.1
    b_ih = jax.random.normal(ks[3], (4 * hidden_dim,), jnp.float32) * 0.1
    b_hh = jax.random.normal(ks[4], (4 * hidden_dim,), jnp.float32) * 0.1
    w_lr = jax.random.normal(ks[5], (1, hidden_dim), jnp.float32) * 0.1
    b_lr = jax.random.normal(ks[6], (1,), jnp.float32) * 0.1

    # Inputs: token ids (B, T) and lengths (B,)
    inputs_text = jax.random.randint(ks[7], (B, T), 0, vocab, dtype=jnp.int32)
    inputs_text_len = jnp.array([T, 5], dtype=jnp.int32)

    # Glue: embedding lookup (gather). nn.Dropout is eval-mode identity.
    input_emb = jnp.take(embedding_matrix, inputs_text, axis=0)        # (B, T, E)

    ref = reference_forward(input_emb.astype(jnp.float32), inputs_text_len,
                            w_ih, w_hh, b_ih, b_hh, w_lr, b_lr)

    # Exact f32 MXU-operand path (safest everywhere, incl. v5e).
    out_f32 = lstm_forward(input_emb, inputs_text_len, w_ih, w_hh, b_ih, b_hh,
                           w_lr, b_lr, matmul_dtype=jnp.float32)
    out_f32 = jax.block_until_ready(out_f32)
    np.testing.assert_allclose(np.asarray(out_f32), np.asarray(ref),
                               rtol=1e-4, atol=1e-5)

    # bf16 MXU operands (recommended on v6e/v7x); elementwise math stays f32,
    # so only matmul rounding differs -> loose tolerance.
    out_bf16 = lstm_forward(input_emb, inputs_text_len, w_ih, w_hh, b_ih, b_hh,
                            w_lr, b_lr, matmul_dtype=jnp.bfloat16)
    out_bf16 = jax.block_until_ready(out_bf16)
    np.testing.assert_allclose(np.asarray(out_bf16), np.asarray(ref),
                               rtol=5e-2, atol=5e-2)

    print("KERNEL_OK")
</pallas_src>

<mosaic_0001>
module attributes {stable_mosaic.version = 11 : i64} {
  func.func @lstm_head_kernel(%arg0: i32, %arg1: memref<8x8x32xf32, #tpu.memory_space<vmem>>, %arg2: memref<8x8x128xf32, #tpu.memory_space<vmem>>, %arg3: memref<32x512xf32, #tpu.memory_space<vmem>>, %arg4: memref<128x512xf32, #tpu.memory_space<vmem>>, %arg5: memref<1x512xf32, #tpu.memory_space<vmem>>, %arg6: memref<1x128xf32, #tpu.memory_space<vmem>>, %arg7: memref<1x1xf32, #tpu.memory_space<vmem>>, %arg8: memref<8x1xf32, #tpu.memory_space<vmem>>, %arg9: memref<64x512xf32, #tpu.memory_space<vmem>>) attributes {dimension_semantics = [#tpu.dimension_semantics<parallel>], iteration_bounds = array<i64: 1>, scalar_prefetch = 0 : i64, scratch_operands = 1 : i64, tpu.core_type = #tpu.core_type<tc>, window_params = [{transform_indices = @transform_0, window_bounds = array<i64: 8, 8, 32>}, {transform_indices = @transform_1, window_bounds = array<i64: 8, 8, 128>}, {pipeline_mode = #tpu.pipeline_mode<synchronous>, transform_indices = @transform_2, window_bounds = array<i64: 32, 512>}, {pipeline_mode = #tpu.pipeline_mode<synchronous>, transform_indices = @transform_3, window_bounds = array<i64: 128, 512>}, {pipeline_mode = #tpu.pipeline_mode<synchronous>, transform_indices = @transform_4, window_bounds = array<i64: 1, 512>}, {pipeline_mode = #tpu.pipeline_mode<synchronous>, transform_indices = @transform_5, window_bounds = array<i64: 1, 128>}, {pipeline_mode = #tpu.pipeline_mode<synchronous>, transform_indices = @transform_6, window_bounds = array<i64: 1, 1>}, {transform_indices = @transform_7, window_bounds = array<i64: 8, 1>}]} {
    %c0 = arith.constant 0 : index
    %c0_0 = arith.constant 0 : index
    %c0_1 = arith.constant 0 : index
    %0 = vector.load %arg1[%c0, %c0_0, %c0_1] : memref<8x8x32xf32, #tpu.memory_space<vmem>>, vector<8x8x32xf32>
    %1 = vector.shape_cast %0 : vector<8x8x32xf32> to vector<64x32xf32>
    %c0_2 = arith.constant 0 : index
    %c0_3 = arith.constant 0 : index
    %2 = vector.load %arg3[%c0_2, %c0_3] : memref<32x512xf32, #tpu.memory_space<vmem>>, vector<32x512xf32>
    %cst = arith.constant dense<0.000000e+00> : vector<64x512xf32>
    %3 = tpu.matmul %1, %2, %cst {dimension_numbers = #tpu.dot_dimension_numbers<[1], [0], [0], [1], [0, 0, 1, 1], [], []>} : vector<64x32xf32>, vector<32x512xf32>, vector<64x512xf32> -> vector<64x512xf32>
    %c0_4 = arith.constant 0 : index
    %c0_5 = arith.constant 0 : index
    %4 = vector.load %arg5[%c0_4, %c0_5] : memref<1x512xf32, #tpu.memory_space<vmem>>, vector<1x512xf32>
    %5 = vector.broadcast %4 : vector<1x512xf32> to vector<64x512xf32>
    %6 = arith.addf %3, %5 : vector<64x512xf32>
    %c0_6 = arith.constant 0 : index
    %c0_7 = arith.constant 0 : index
    %7 = vector.load %arg9[%c0_6, %c0_7] : memref<64x512xf32, #tpu.memory_space<vmem>>, vector<64x512xf32>
    tpu.vector_store %arg9[%c0_6, %c0_7], %6 {strides = array<i32>} : memref<64x512xf32, #tpu.memory_space<vmem>>, vector<64x512xf32>,
    %cst_8 = arith.constant 0.000000e+00 : f32
    %8 = vector.broadcast %cst_8 : f32 to vector<8x128xf32>
    %cst_9 = arith.constant 0.000000e+00 : f32
    %9 = vector.broadcast %cst_9 : f32 to vector<8x128xf32>
    %cst_10 = arith.constant 0.000000e+00 : f32
    %10 = vector.broadcast %cst_10 : f32 to vector<8x128xf32>
    %c0_11 = arith.constant 0 : index
    %c0_12 = arith.constant 0 : index
    %11 = vector.load %arg9[%c0_11, %c0_12] : memref<64x512xf32, #tpu.memory_space<vmem>>, vector<8x512xf32>
    %c0_13 = arith.constant 0 : index
    %c0_14 = arith.constant 0 : index
    %12 = vector.load %arg4[%c0_13, %c0_14] : memref<128x512xf32, #tpu.memory_space<vmem>>, vector<128x512xf32>
    %cst_15 = arith.constant dense<0.000000e+00> : vector<8x512xf32>
    %13 = tpu.matmul %8, %12, %cst_15 {dimension_numbers = #tpu.dot_dimension_numbers<[1], [0], [0], [1], [0, 0, 1, 1], [], []>} : vector<8x128xf32>, vector<128x512xf32>, vector<8x512xf32> -> vector<8x512xf32>
    %14 = arith.addf %11, %13 : vector<8x512xf32>
    %15 = vector.extract_strided_slice %14 {offsets = [0, 0], sizes = [8, 128], strides = [1, 1]} : vector<8x512xf32> to vector<8x128xf32>
    %16 = arith.negf %15 : vector<8x128xf32>
    %17 = math.exp %16 : vector<8x128xf32>
    %cst_16 = arith.constant 1.000000e+00 : f32
    %18 = vector.broadcast %cst_16 : f32 to vector<8x128xf32>
    %19 = arith.addf %18, %17 : vector<8x128xf32>
    %20 = arith.divf %18, %19 : vector<8x128xf32>
    %21 = vector.extract_strided_slice %14 {offsets = [0, 128], sizes = [8, 128], strides = [1, 1]} : vector<8x512xf32> to vector<8x128xf32>
    %22 = arith.negf %21 : vector<8x128xf32>
    %23 = math.exp %22 : vector<8x128xf32>
    %cst_17 = arith.constant 1.000000e+00 : f32
    %24 = vector.broadcast %cst_17 : f32 to vector<8x128xf32>
    %25 = arith.addf %24, %23 : vector<8x128xf32>
    %26 = arith.divf %24, %25 : vector<8x128xf32>
    %27 = vector.extract_strided_slice %14 {offsets = [0, 256], sizes = [8, 128], strides = [1, 1]} : vector<8x512xf32> to vector<8x128xf32>
    %28 = math.tanh %27 : vector<8x128xf32>
    %29 = vector.extract_strided_slice %14 {offsets = [0, 384], sizes = [8, 128], strides = [1, 1]} : vector<8x512xf32> to vector<8x128xf32>
    %30 = arith.negf %29 : vector<8x128xf32>
    %31 = math.exp %30 : vector<8x128xf32>
    %cst_18 = arith.constant 1.000000e+00 : f32
    %32 = vector.broadcast %cst_18 : f32 to vector<8x128xf32>
    %33 = arith.addf %32, %31 : vector<8x128xf32>
    %34 = arith.divf %32, %33 : vector<8x128xf32>
    %35 = arith.mulf %26, %9 : vector<8x128xf32>
    %36 = arith.mulf %20, %28 : vector<8x128xf32>
    %37 = arith.addf %35, %36 : vector<8x128xf32>
    %38 = math.tanh %37 : vector<8x128xf32>
    %39 = arith.mulf %34, %38 : vector<8x128xf32>
    %c0_19 = arith.constant 0 : index
    %c0_20 = arith.constant 0 : index
    %c0_21 = arith.constant 0 : index
    %40 = vector.load %arg2[%c0_19, %c0_20, %c0_21] : memref<8x8x128xf32, #tpu.memory_space<vmem>>, vector<1x8x128xf32>
    %41 = vector.shape_cast %40 : vector<1x8x128xf32> to vector<8x128xf32>
    %42 = arith.mulf %41, %39 : vector<8x128xf32>
    %43 = arith.addf %10, %42 : vector<8x128xf32>
    %c8 = arith.constant 8 : index
    %c0_22 = arith.constant 0 : index
    %44 = vector.load %arg9[%c8, %c0_22] : memref<64x512xf32, #tpu.memory_space<vmem>>, vector<8x512xf32>
    %c0_23 = arith.constant 0 : index
    %c0_24 = arith.constant 0 : index
    %45 = vector.load %arg4[%c0_23, %c0_24] : memref<128x512xf32, #tpu.memory_space<vmem>>, vector<128x512xf32>
    %cst_25 = arith.constant dense<0.000000e+00> : vector<8x512xf32>
    %46 = tpu.matmul %39, %45, %cst_25 {dimension_numbers = #tpu.dot_dimension_numbers<[1], [0], [0], [1], [0, 0, 1, 1], [], []>} : vector<8x128xf32>, vector<128x512xf32>, vector<8x512xf32> -> vector<8x512xf32>
    %47 = arith.addf %44, %46 : vector<8x512xf32>
    %48 = vector.extract_strided_slice %47 {offsets = [0, 0], sizes = [8, 128], strides = [1, 1]} : vector<8x512xf32> to vector<8x128xf32>
    %49 = arith.negf %48 : vector<8x128xf32>
    %50 = math.exp %49 : vector<8x128xf32>
    %cst_26 = arith.constant 1.000000e+00 : f32
    %51 = vector.broadcast %cst_26 : f32 to vector<8x128xf32>
    %52 = arith.addf %51, %50 : vector<8x128xf32>
    %53 = arith.divf %51, %52 : vector<8x128xf32>
    %54 = vector.extract_strided_slice %47 {offsets = [0, 128], sizes = [8, 128], strides = [1, 1]} : vector<8x512xf32> to vector<8x128xf32>
    %55 = arith.negf %54 : vector<8x128xf32>
    %56 = math.exp %55 : vector<8x128xf32>
    %cst_27 = arith.constant 1.000000e+00 : f32
    %57 = vector.broadcast %cst_27 : f32 to vector<8x128xf32>
    %58 = arith.addf %57, %56 : vector<8x128xf32>
    %59 = arith.divf %57, %58 : vector<8x128xf32>
    %60 = vector.extract_strided_slice %47 {offsets = [0, 256], sizes = [8, 128], strides = [1, 1]} : vector<8x512xf32> to vector<8x128xf32>
    %61 = math.tanh %60 : vector<8x128xf32>
    %62 = vector.extract_strided_slice %47 {offsets = [0, 384], sizes = [8, 128], strides = [1, 1]} : vector<8x512xf32> to vector<8x128xf32>
    %63 = arith.negf %62 : vector<8x128xf32>
    %64 = math.exp %63 : vector<8x128xf32>
    %cst_28 = arith.constant 1.000000e+00 : f32
    %65 = vector.broadcast %cst_28 : f32 to vector<8x128xf32>
    %66 = arith.addf %65, %64 : vector<8x128xf32>
    %67 = arith.divf %65, %66 : vector<8x128xf32>
    %68 = arith.mulf %59, %37 : vector<8x128xf32>
    %69 = arith.mulf %53, %61 : vector<8x128xf32>
    %70 = arith.addf %68, %69 : vector<8x128xf32>
    %71 = math.tanh %70 : vector<8x128xf32>
    %72 = arith.mulf %67, %71 : vector<8x128xf32>
    %c1 = arith.constant 1 : index
    %c0_29 = arith.constant 0 : index
    %c0_30 = arith.constant 0 : index
    %73 = vector.load %arg2[%c1, %c0_29, %c0_30] : memref<8x8x128xf32, #tpu.memory_space<vmem>>, vector<1x8x128xf32>
    %74 = vector.shape_cast %73 : vector<1x8x128xf32> to vector<8x128xf32>
    %75 = arith.mulf %74, %72 : vector<8x128xf32>
    %76 = arith.addf %43, %75 : vector<8x128xf32>
    %c16 = arith.constant 16 : index
    %c0_31 = arith.constant 0 : index
    %77 = vector.load %arg9[%c16, %c0_31] : memref<64x512xf32, #tpu.memory_space<vmem>>, vector<8x512xf32>
    %c0_32 = arith.constant 0 : index
    %c0_33 = arith.constant 0 : index
    %78 = vector.load %arg4[%c0_32, %c0_33] : memref<128x512xf32, #tpu.memory_space<vmem>>, vector<128x512xf32>
    %cst_34 = arith.constant dense<0.000000e+00> : vector<8x512xf32>
    %79 = tpu.matmul %72, %78, %cst_34 {dimension_numbers = #tpu.dot_dimension_numbers<[1], [0], [0], [1], [0, 0, 1, 1], [], []>} : vector<8x128xf32>, vector<128x512xf32>, vector<8x512xf32> -> vector<8x512xf32>
    %80 = arith.addf %77, %79 : vector<8x512xf32>
    %81 = vector.extract_strided_slice %80 {offsets = [0, 0], sizes = [8, 128], strides = [1, 1]} : vector<8x512xf32> to vector<8x128xf32>
    %82 = arith.negf %81 : vector<8x128xf32>
    %83 = math.exp %82 : vector<8x128xf32>
    %cst_35 = arith.constant 1.000000e+00 : f32
    %84 = vector.broadcast %cst_35 : f32 to vector<8x128xf32>
    %85 = arith.addf %84, %83 : vector<8x128xf32>
    %86 = arith.divf %84, %85 : vector<8x128xf32>
    %87 = vector.extract_strided_slice %80 {offsets = [0, 128], sizes = [8, 128], strides = [1, 1]} : vector<8x512xf32> to vector<8x128xf32>
    %88 = arith.negf %87 : vector<8x128xf32>
    %89 = math.exp %88 : vector<8x128xf32>
    %cst_36 = arith.constant 1.000000e+00 : f32
    %90 = vector.broadcast %cst_36 : f32 to vector<8x128xf32>
    %91 = arith.addf %90, %89 : vector<8x128xf32>
    %92 = arith.divf %90, %91 : vector<8x128xf32>
    %93 = vector.extract_strided_slice %80 {offsets = [0, 256], sizes = [8, 128], strides = [1, 1]} : vector<8x512xf32> to vector<8x128xf32>
    %94 = math.tanh %93 : vector<8x128xf32>
    %95 = vector.extract_strided_slice %80 {offsets = [0, 384], sizes = [8, 128], strides = [1, 1]} : vector<8x512xf32> to vector<8x128xf32>
    %96 = arith.negf %95 : vector<8x128xf32>
    %97 = math.exp %96 : vector<8x128xf32>
    %cst_37 = arith.constant 1.000000e+00 : f32
    %98 = vector.broadcast %cst_37 : f32 to vector<8x128xf32>
    %99 = arith.addf %98, %97 : vector<8x128xf32>
    %100 = arith.divf %98, %99 : vector<8x128xf32>
    %101 = arith.mulf %92, %70 : vector<8x128xf32>
    %102 = arith.mulf %86, %94 : vector<8x128xf32>
    %103 = arith.addf %101, %102 : vector<8x128xf32>
    %104 = math.tanh %103 : vector<8x128xf32>
    %105 = arith.mulf %100, %104 : vector<8x128xf32>
    %c2 = arith.constant 2 : index
    %c0_38 = arith.constant 0 : index
    %c0_39 = arith.constant 0 : index
    %106 = vector.load %arg2[%c2, %c0_38, %c0_39] : memref<8x8x128xf32, #tpu.memory_space<vmem>>, vector<1x8x128xf32>
    %107 = vector.shape_cast %106 : vector<1x8x128xf32> to vector<8x128xf32>
    %108 = arith.mulf %107, %105 : vector<8x128xf32>
    %109 = arith.addf %76, %108 : vector<8x128xf32>
    %c24 = arith.constant 24 : index
    %c0_40 = arith.constant 0 : index
    %110 = vector.load %arg9[%c24, %c0_40] : memref<64x512xf32, #tpu.memory_space<vmem>>, vector<8x512xf32>
    %c0_41 = arith.constant 0 : index
    %c0_42 = arith.constant 0 : index
    %111 = vector.load %arg4[%c0_41, %c0_42] : memref<128x512xf32, #tpu.memory_space<vmem>>, vector<128x512xf32>
    %cst_43 = arith.constant dense<0.000000e+00> : vector<8x512xf32>
    %112 = tpu.matmul %105, %111, %cst_43 {dimension_numbers = #tpu.dot_dimension_numbers<[1], [0], [0], [1], [0, 0, 1, 1], [], []>} : vector<8x128xf32>, vector<128x512xf32>, vector<8x512xf32> -> vector<8x512xf32>
    %113 = arith.addf %110, %112 : vector<8x512xf32>
    %114 = vector.extract_strided_slice %113 {offsets = [0, 0], sizes = [8, 128], strides = [1, 1]} : vector<8x512xf32> to vector<8x128xf32>
    %115 = arith.negf %114 : vector<8x128xf32>
    %116 = math.exp %115 : vector<8x128xf32>
    %cst_44 = arith.constant 1.000000e+00 : f32
    %117 = vector.broadcast %cst_44 : f32 to vector<8x128xf32>
    %118 = arith.addf %117, %116 : vector<8x128xf32>
    %119 = arith.divf %117, %118 : vector<8x128xf32>
    %120 = vector.extract_strided_slice %113 {offsets = [0, 128], sizes = [8, 128], strides = [1, 1]} : vector<8x512xf32> to vector<8x128xf32>
    %121 = arith.negf %120 : vector<8x128xf32>
    %122 = math.exp %121 : vector<8x128xf32>
    %cst_45 = arith.constant 1.000000e+00 : f32
    %123 = vector.broadcast %cst_45 : f32 to vector<8x128xf32>
    %124 = arith.addf %123, %122 : vector<8x128xf32>
    %125 = arith.divf %123, %124 : vector<8x128xf32>
    %126 = vector.extract_strided_slice %113 {offsets = [0, 256], sizes = [8, 128], strides = [1, 1]} : vector<8x512xf32> to vector<8x128xf32>
    %127 = math.tanh %126 : vector<8x128xf32>
    %128 = vector.extract_strided_slice %113 {offsets = [0, 384], sizes = [8, 128], strides = [1, 1]} : vector<8x512xf32> to vector<8x128xf32>
    %129 = arith.negf %128 : vector<8x128xf32>
    %130 = math.exp %129 : vector<8x128xf32>
    %cst_46 = arith.constant 1.000000e+00 : f32
    %131 = vector.broadcast %cst_46 : f32 to vector<8x128xf32>
    %132 = arith.addf %131, %130 : vector<8x128xf32>
    %133 = arith.divf %131, %132 : vector<8x128xf32>
    %134 = arith.mulf %125, %103 : vector<8x128xf32>
    %135 = arith.mulf %119, %127 : vector<8x128xf32>
    %136 = arith.addf %134, %135 : vector<8x128xf32>
    %137 = math.tanh %136 : vector<8x128xf32>
    %138 = arith.mulf %133, %137 : vector<8x128xf32>
    %c3 = arith.constant 3 : index
    %c0_47 = arith.constant 0 : index
    %c0_48 = arith.constant 0 : index
    %139 = vector.load %arg2[%c3, %c0_47, %c0_48] : memref<8x8x128xf32, #tpu.memory_space<vmem>>, vector<1x8x128xf32>
    %140 = vector.shape_cast %139 : vector<1x8x128xf32> to vector<8x128xf32>
    %141 = arith.mulf %140, %138 : vector<8x128xf32>
    %142 = arith.addf %109, %141 : vector<8x128xf32>
    %c32 = arith.constant 32 : index
    %c0_49 = arith.constant 0 : index
    %143 = vector.load %arg9[%c32, %c0_49] : memref<64x512xf32, #tpu.memory_space<vmem>>, vector<8x512xf32>
    %c0_50 = arith.constant 0 : index
    %c0_51 = arith.constant 0 : index
    %144 = vector.load %arg4[%c0_50, %c0_51] : memref<128x512xf32, #tpu.memory_space<vmem>>, vector<128x512xf32>
    %cst_52 = arith.constant dense<0.000000e+00> : vector<8x512xf32>
    %145 = tpu.matmul %138, %144, %cst_52 {dimension_numbers = #tpu.dot_dimension_numbers<[1], [0], [0], [1], [0, 0, 1, 1], [], []>} : vector<8x128xf32>, vector<128x512xf32>, vector<8x512xf32> -> vector<8x512xf32>
    %146 = arith.addf %143, %145 : vector<8x512xf32>
    %147 = vector.extract_strided_slice %146 {offsets = [0, 0], sizes = [8, 128], strides = [1, 1]} : vector<8x512xf32> to vector<8x128xf32>
    %148 = arith.negf %147 : vector<8x128xf32>
    %149 = math.exp %148 : vector<8x128xf32>
    %cst_53 = arith.constant 1.000000e+00 : f32
    %150 = vector.broadcast %cst_53 : f32 to vector<8x128xf32>
    %151 = arith.addf %150, %149 : vector<8x128xf32>
    %152 = arith.divf %150, %151 : vector<8x128xf32>
    %153 = vector.extract_strided_slice %146 {offsets = [0, 128], sizes = [8, 128], strides = [1, 1]} : vector<8x512xf32> to vector<8x128xf32>
    %154 = arith.negf %153 : vector<8x128xf32>
    %155 = math.exp %154 : vector<8x128xf32>
    %cst_54 = arith.constant 1.000000e+00 : f32
    %156 = vector.broadcast %cst_54 : f32 to vector<8x128xf32>
    %157 = arith.addf %156, %155 : vector<8x128xf32>
    %158 = arith.divf %156, %157 : vector<8x128xf32>
    %159 = vector.extract_strided_slice %146 {offsets = [0, 256], sizes = [8, 128], strides = [1, 1]} : vector<8x512xf32> to vector<8x128xf32>
    %160 = math.tanh %159 : vector<8x128xf32>
    %161 = vector.extract_strided_slice %146 {offsets = [0, 384], sizes = [8, 128], strides = [1, 1]} : vector<8x512xf32> to vector<8x128xf32>
    %162 = arith.negf %161 : vector<8x128xf32>
    %163 = math.exp %162 : vector<8x128xf32>
    %cst_55 = arith.constant 1.000000e+00 : f32
    %164 = vector.broadcast %cst_55 : f32 to vector<8x128xf32>
    %165 = arith.addf %164, %163 : vector<8x128xf32>
    %166 = arith.divf %164, %165 : vector<8x128xf32>
    %167 = arith.mulf %158, %136 : vector<8x128xf32>
    %168 = arith.mulf %152, %160 : vector<8x128xf32>
    %169 = arith.addf %167, %168 : vector<8x128xf32>
    %170 = math.tanh %169 : vector<8x128xf32>
    %171 = arith.mulf %166, %170 : vector<8x128xf32>
    %c4 = arith.constant 4 : index
    %c0_56 = arith.constant 0 : index
    %c0_57 = arith.constant 0 : index
    %172 = vector.load %arg2[%c4, %c0_56, %c0_57] : memref<8x8x128xf32, #tpu.memory_space<vmem>>, vector<1x8x128xf32>
    %173 = vector.shape_cast %172 : vector<1x8x128xf32> to vector<8x128xf32>
    %174 = arith.mulf %173, %171 : vector<8x128xf32>
    %175 = arith.addf %142, %174 : vector<8x128xf32>
    %c40 = arith.constant 40 : index
    %c0_58 = arith.constant 0 : index
    %176 = vector.load %arg9[%c40, %c0_58] : memref<64x512xf32, #tpu.memory_space<vmem>>, vector<8x512xf32>
    %c0_59 = arith.constant 0 : index
    %c0_60 = arith.constant 0 : index
    %177 = vector.load %arg4[%c0_59, %c0_60] : memref<128x512xf32, #tpu.memory_space<vmem>>, vector<128x512xf32>
    %cst_61 = arith.constant dense<0.000000e+00> : vector<8x512xf32>
    %178 = tpu.matmul %171, %177, %cst_61 {dimension_numbers = #tpu.dot_dimension_numbers<[1], [0], [0], [1], [0, 0, 1, 1], [], []>} : vector<8x128xf32>, vector<128x512xf32>, vector<8x512xf32> -> vector<8x512xf32>
    %179 = arith.addf %176, %178 : vector<8x512xf32>
    %180 = vector.extract_strided_slice %179 {offsets = [0, 0], sizes = [8, 128], strides = [1, 1]} : vector<8x512xf32> to vector<8x128xf32>
    %181 = arith.negf %180 : vector<8x128xf32>
    %182 = math.exp %181 : vector<8x128xf32>
    %cst_62 = arith.constant 1.000000e+00 : f32
    %183 = vector.broadcast %cst_62 : f32 to vector<8x128xf32>
    %184 = arith.addf %183, %182 : vector<8x128xf32>
    %185 = arith.divf %183, %184 : vector<8x128xf32>
    %186 = vector.extract_strided_slice %179 {offsets = [0, 128], sizes = [8, 128], strides = [1, 1]} : vector<8x512xf32> to vector<8x128xf32>
    %187 = arith.negf %186 : vector<8x128xf32>
    %188 = math.exp %187 : vector<8x128xf32>
    %cst_63 = arith.constant 1.000000e+00 : f32
    %189 = vector.broadcast %cst_63 : f32 to vector<8x128xf32>
    %190 = arith.addf %189, %188 : vector<8x128xf32>
    %191 = arith.divf %189, %190 : vector<8x128xf32>
    %192 = vector.extract_strided_slice %179 {offsets = [0, 256], sizes = [8, 128], strides = [1, 1]} : vector<8x512xf32> to vector<8x128xf32>
    %193 = math.tanh %192 : vector<8x128xf32>
    %194 = vector.extract_strided_slice %179 {offsets = [0, 384], sizes = [8, 128], strides = [1, 1]} : vector<8x512xf32> to vector<8x128xf32>
    %195 = arith.negf %194 : vector<8x128xf32>
    %196 = math.exp %195 : vector<8x128xf32>
    %cst_64 = arith.constant 1.000000e+00 : f32
    %197 = vector.broadcast %cst_64 : f32 to vector<8x128xf32>
    %198 = arith.addf %197, %196 : vector<8x128xf32>
    %199 = arith.divf %197, %198 : vector<8x128xf32>
    %200 = arith.mulf %191, %169 : vector<8x128xf32>
    %201 = arith.mulf %185, %193 : vector<8x128xf32>
    %202 = arith.addf %200, %201 : vector<8x128xf32>
    %203 = math.tanh %202 : vector<8x128xf32>
    %204 = arith.mulf %199, %203 : vector<8x128xf32>
    %c5 = arith.constant 5 : index
    %c0_65 = arith.constant 0 : index
    %c0_66 = arith.constant 0 : index
    %205 = vector.load %arg2[%c5, %c0_65, %c0_66] : memref<8x8x128xf32, #tpu.memory_space<vmem>>, vector<1x8x128xf32>
    %206 = vector.shape_cast %205 : vector<1x8x128xf32> to vector<8x128xf32>
    %207 = arith.mulf %206, %204 : vector<8x128xf32>
    %208 = arith.addf %175, %207 : vector<8x128xf32>
    %c48 = arith.constant 48 : index
    %c0_67 = arith.constant 0 : index
    %209 = vector.load %arg9[%c48, %c0_67] : memref<64x512xf32, #tpu.memory_space<vmem>>, vector<8x512xf32>
    %c0_68 = arith.constant 0 : index
    %c0_69 = arith.constant 0 : index
    %210 = vector.load %arg4[%c0_68, %c0_69] : memref<128x512xf32, #tpu.memory_space<vmem>>, vector<128x512xf32>
    %cst_70 = arith.constant dense<0.000000e+00> : vector<8x512xf32>
    %211 = tpu.matmul %204, %210, %cst_70 {dimension_numbers = #tpu.dot_dimension_numbers<[1], [0], [0], [1], [0, 0, 1, 1], [], []>} : vector<8x128xf32>, vector<128x512xf32>, vector<8x512xf32> -> vector<8x512xf32>
    %212 = arith.addf %209, %211 : vector<8x512xf32>
    %213 = vector.extract_strided_slice %212 {offsets = [0, 0], sizes = [8, 128], strides = [1, 1]} : vector<8x512xf32> to vector<8x128xf32>
    %214 = arith.negf %213 : vector<8x128xf32>
    %215 = math.exp %214 : vector<8x128xf32>
    %cst_71 = arith.constant 1.000000e+00 : f32
    %216 = vector.broadcast %cst_71 : f32 to vector<8x128xf32>
    %217 = arith.addf %216, %215 : vector<8x128xf32>
    %218 = arith.divf %216, %217 : vector<8x128xf32>
    %219 = vector.extract_strided_slice %212 {offsets = [0, 128], sizes = [8, 128], strides = [1, 1]} : vector<8x512xf32> to vector<8x128xf32>
    %220 = arith.negf %219 : vector<8x128xf32>
    %221 = math.exp %220 : vector<8x128xf32>
    %cst_72 = arith.constant 1.000000e+00 : f32
    %222 = vector.broadcast %cst_72 : f32 to vector<8x128xf32>
    %223 = arith.addf %222, %221 : vector<8x128xf32>
    %224 = arith.divf %222, %223 : vector<8x128xf32>
    %225 = vector.extract_strided_slice %212 {offsets = [0, 256], sizes = [8, 128], strides = [1, 1]} : vector<8x512xf32> to vector<8x128xf32>
    %226 = math.tanh %225 : vector<8x128xf32>
    %227 = vector.extract_strided_slice %212 {offsets = [0, 384], sizes = [8, 128], strides = [1, 1]} : vector<8x512xf32> to vector<8x128xf32>
    %228 = arith.negf %227 : vector<8x128xf32>
    %229 = math.exp %228 : vector<8x128xf32>
    %cst_73 = arith.constant 1.000000e+00 : f32
    %230 = vector.broadcast %cst_73 : f32 to vector<8x128xf32>
    %231 = arith.addf %230, %229 : vector<8x128xf32>
    %232 = arith.divf %230, %231 : vector<8x128xf32>
    %233 = arith.mulf %224, %202 : vector<8x128xf32>
    %234 = arith.mulf %218, %226 : vector<8x128xf32>
    %235 = arith.addf %233, %234 : vector<8x128xf32>
    %236 = math.tanh %235 : vector<8x128xf32>
    %237 = arith.mulf %232, %236 : vector<8x128xf32>
    %c6 = arith.constant 6 : index
    %c0_74 = arith.constant 0 : index
    %c0_75 = arith.constant 0 : index
    %238 = vector.load %arg2[%c6, %c0_74, %c0_75] : memref<8x8x128xf32, #tpu.memory_space<vmem>>, vector<1x8x128xf32>
    %239 = vector.shape_cast %238 : vector<1x8x128xf32> to vector<8x128xf32>
    %240 = arith.mulf %239, %237 : vector<8x128xf32>
    %241 = arith.addf %208, %240 : vector<8x128xf32>
    %c56 = arith.constant 56 : index
    %c0_76 = arith.constant 0 : index
    %242 = vector.load %arg9[%c56, %c0_76] : memref<64x512xf32, #tpu.memory_space<vmem>>, vector<8x512xf32>
    %c0_77 = arith.constant 0 : index
    %c0_78 = arith.constant 0 : index
    %243 = vector.load %arg4[%c0_77, %c0_78] : memref<128x512xf32, #tpu.memory_space<vmem>>, vector<128x512xf32>
    %cst_79 = arith.constant dense<0.000000e+00> : vector<8x512xf32>
    %244 = tpu.matmul %237, %243, %cst_79 {dimension_numbers = #tpu.dot_dimension_numbers<[1], [0], [0], [1], [0, 0, 1, 1], [], []>} : vector<8x128xf32>, vector<128x512xf32>, vector<8x512xf32> -> vector<8x512xf32>
    %245 = arith.addf %242, %244 : vector<8x512xf32>
    %246 = vector.extract_strided_slice %245 {offsets = [0, 0], sizes = [8, 128], strides = [1, 1]} : vector<8x512xf32> to vector<8x128xf32>
    %247 = arith.negf %246 : vector<8x128xf32>
    %248 = math.exp %247 : vector<8x128xf32>
    %cst_80 = arith.constant 1.000000e+00 : f32
    %249 = vector.broadcast %cst_80 : f32 to vector<8x128xf32>
    %250 = arith.addf %249, %248 : vector<8x128xf32>
    %251 = arith.divf %249, %250 : vector<8x128xf32>
    %252 = vector.extract_strided_slice %245 {offsets = [0, 128], sizes = [8, 128], strides = [1, 1]} : vector<8x512xf32> to vector<8x128xf32>
    %253 = arith.negf %252 : vector<8x128xf32>
    %254 = math.exp %253 : vector<8x128xf32>
    %cst_81 = arith.constant 1.000000e+00 : f32
    %255 = vector.broadcast %cst_81 : f32 to vector<8x128xf32>
    %256 = arith.addf %255, %254 : vector<8x128xf32>
    %257 = arith.divf %255, %256 : vector<8x128xf32>
    %258 = vector.extract_strided_slice %245 {offsets = [0, 256], sizes = [8, 128], strides = [1, 1]} : vector<8x512xf32> to vector<8x128xf32>
    %259 = math.tanh %258 : vector<8x128xf32>
    %260 = vector.extract_strided_slice %245 {offsets = [0, 384], sizes = [8, 128], strides = [1, 1]} : vector<8x512xf32> to vector<8x128xf32>
    %261 = arith.negf %260 : vector<8x128xf32>
    %262 = math.exp %261 : vector<8x128xf32>
    %cst_82 = arith.constant 1.000000e+00 : f32
    %263 = vector.broadcast %cst_82 : f32 to vector<8x128xf32>
    %264 = arith.addf %263, %262 : vector<8x128xf32>
    %265 = arith.divf %263, %264 : vector<8x128xf32>
    %266 = arith.mulf %257, %235 : vector<8x128xf32>
    %267 = arith.mulf %251, %259 : vector<8x128xf32>
    %268 = arith.addf %266, %267 : vector<8x128xf32>
    %269 = math.tanh %268 : vector<8x128xf32>
    %270 = arith.mulf %265, %269 : vector<8x128xf32>
    %c7 = arith.constant 7 : index
    %c0_83 = arith.constant 0 : index
    %c0_84 = arith.constant 0 : index
    %271 = vector.load %arg2[%c7, %c0_83, %c0_84] : memref<8x8x128xf32, #tpu.memory_space<vmem>>, vector<1x8x128xf32>
    %272 = vector.shape_cast %271 : vector<1x8x128xf32> to vector<8x128xf32>
    %273 = arith.mulf %272, %270 : vector<8x128xf32>
    %274 = arith.addf %241, %273 : vector<8x128xf32>
    %c0_85 = arith.constant 0 : index
    %c0_86 = arith.constant 0 : index
    %275 = vector.load %arg6[%c0_85, %c0_86] : memref<1x128xf32, #tpu.memory_space<vmem>>, vector<1x128xf32>
    %276 = vector.broadcast %275 : vector<1x128xf32> to vector<8x128xf32>
    %277 = arith.mulf %274, %276 : vector<8x128xf32>
    %cst_87 = arith.constant dense<0.000000e+00> : vector<8xf32>
    %278 = vector.multi_reduction <add>, %277, %cst_87 [1] : vector<8x128xf32> to vector<8xf32>
    %279 = vector.shape_cast %278 : vector<8xf32> to vector<8x1xf32>
    %c0_88 = arith.constant 0 : index
    %c0_89 = arith.constant 0 : index
    %280 = vector.load %arg7[%c0_88, %c0_89] : memref<1x1xf32, #tpu.memory_space<vmem>>, vector<1x1xf32>
    %281 = vector.broadcast %280 : vector<1x1xf32> to vector<8x1xf32>
    %282 = arith.addf %279, %281 : vector<8x1xf32>
    %283 = arith.negf %282 : vector<8x1xf32>
    %284 = math.exp %283 : vector<8x1xf32>
    %cst_90 = arith.constant 1.000000e+00 : f32
    %285 = vector.broadcast %cst_90 : f32 to vector<8x1xf32>
    %286 = arith.addf %285, %284 : vector<8x1xf32>
    %287 = arith.divf %285, %286 : vector<8x1xf32>
    %c0_91 = arith.constant 0 : index
    %c0_92 = arith.constant 0 : index
    %288 = vector.load %arg8[%c0_91, %c0_92] : memref<8x1xf32, #tpu.memory_space<vmem>>, vector<8x1xf32>
    tpu.vector_store %arg8[%c0_91, %c0_92], %287 {strides = array<i32>} : memref<8x1xf32, #tpu.memory_space<vmem>>, vector<8x1xf32>,
    return
  }
  func.func @transform_0(%arg0: i32) -> (i32, i32, i32) {
    %c0_i32 = arith.constant 0 : i32
    %c0_i32_0 = arith.constant 0 : i32
    %c0_i32_1 = arith.constant 0 : i32
    return %c0_i32, %arg0, %c0_i32_0 : i32, i32, i32
  }
  func.func @transform_1(%arg0: i32) -> (i32, i32, i32) {
    %c0_i32 = arith.constant 0 : i32
    %c0_i32_0 = arith.constant 0 : i32
    %c0_i32_1 = arith.constant 0 : i32
    return %c0_i32, %arg0, %c0_i32_0 : i32, i32, i32
  }
  func.func @transform_2(%arg0: i32) -> (i32, i32) {
    %c0_i32 = arith.constant 0 : i32
    %c0_i32_0 = arith.constant 0 : i32
    %c0_i32_1 = arith.constant 0 : i32
    return %c0_i32, %c0_i32_0 : i32, i32
  }
  func.func @transform_3(%arg0: i32) -> (i32, i32) {
    %c0_i32 = arith.constant 0 : i32
    %c0_i32_0 = arith.constant 0 : i32
    %c0_i32_1 = arith.constant 0 : i32
    return %c0_i32, %c0_i32_0 : i32, i32
  }
  func.func @transform_4(%arg0: i32) -> (i32, i32) {
    %c0_i32 = arith.constant 0 : i32
    %c0_i32_0 = arith.constant 0 : i32
    %c0_i32_1 = arith.constant 0 : i32
    return %c0_i32, %c0_i32_0 : i32, i32
  }
  func.func @transform_5(%arg0: i32) -> (i32, i32) {
    %c0_i32 = arith.constant 0 : i32
    %c0_i32_0 = arith.constant 0 : i32
    %c0_i32_1 = arith.constant 0 : i32
    return %c0_i32, %c0_i32_0 : i32, i32
  }
  func.func @transform_6(%arg0: i32) -> (i32, i32) {
    %c0_i32 = arith.constant 0 : i32
    %c0_i32_0 = arith.constant 0 : i32
    %c0_i32_1 = arith.constant 0 : i32
    return %c0_i32, %c0_i32_0 : i32, i32
  }
  func.func @transform_7(%arg0: i32) -> (i32, i32) {
    %c0_i32 = arith.constant 0 : i32
    %c0_i32_0 = arith.constant 0 : i32
    return %arg0, %c0_i32 : i32, i32
  }
}

</mosaic_0001>

<llo_original>
// kernel: tpu_custom_call.1
$region0: #{tpu_custom_call.1}
  #allocation0 [shape = 'u32[]', space=smem, size = 0x4, offset = 0x4, fixed_abs, tag = 'smem constant byte address 0x4 - core index']
  #allocation1 [shape = 'u32[72,128]{1,0:T(1,128)}', space=vmem, size = 0x9000, scoped, tag = 'internal scratch']
  #allocation2 [shape = 'f32[64,512]{1,0:T(8,128)}', space=vmem, size = 0x20000, scoped, tag = 'scratch operand']
  #allocation3 [shape = 'f32[1,1]{1,0:T(1,128)S(1)}', space=vmem, size = 0x200, scoped, tag = 'scoped memory for tpu_custom_call.1']
  %s0 = inlined_call_operand.hbm [shape: f32[8,8,32], index: 0, kind: input, shape index: {}]
  %s1 = inlined_call_operand.hbm [shape: f32[8,8,128], index: 1, kind: input, shape index: {}]
  %s2 = inlined_call_operand.hbm [shape: f32[32,512], index: 2, kind: input, shape index: {}]
  %s3 = inlined_call_operand.hbm [shape: f32[128,512], index: 3, kind: input, shape index: {}]
  %s4 = inlined_call_operand.vmem [shape: f32[1,512], index: 4, kind: input, shape index: {}]
  %s5 = inlined_call_operand.vmem [shape: f32[1,128], index: 5, kind: input, shape index: {}]
  %s6 = inlined_call_operand.<no memory space> [shape: f32[1,1], index: 6, kind: input, shape index: {}]
  %s7 = inlined_call_operand.vmem [shape: f32[8,1], index: 7, kind: output, shape index: {}]
  %s8 = sld [smem:[#allocation0]]
  $region54: #{tpu_custom_call.1} parent=0
    _
  %s10 = ssub.s32 1, %s8
  %s11 = scalar_select 0, %s10, %s8
  %v12 = vstv %s6
  %13 = vst [vmem:[#allocation3] sm:$0x1] %v12
  $region1: #{tpu_custom_call.1} parent=0
    #allocation4 [shape = 'u8[32768]{0}', space=vmem, size = 0x8000, scoped, tag = 'input window, operand 0, single buffered']
    #allocation5 [shape = 's32[1]{0}', space=sflag, size = 0x4, scoped, tag = 'scoped memory for tpu_custom_call.1']
    #allocation6 [shape = 'u8[32768]{0}', space=vmem, size = 0x8000, scoped, tag = 'input window, operand 1, single buffered']
    #allocation7 [shape = 's32[1]{0}', space=sflag, size = 0x4, scoped, tag = 'scoped memory for tpu_custom_call.1']
    #allocation8 [shape = 'u8[65536]{0}', space=vmem, size = 0x10000, scoped, tag = 'input window, operand 2, single buffered']
    #allocation9 [shape = 'u8[262144]{0}', space=vmem, size = 0x40000, scoped, tag = 'input window, operand 3, single buffered']
    #allocation10 [shape = 's32[1]{0}', space=sflag, size = 0x4, scoped, tag = 'scoped memory for tpu_custom_call.1']
    %14 = vsyncpa [#allocation5], 0
    %15 = vsyncpa [#allocation7], 0
    %16 = vsyncpa [#allocation10], 0
    // Predicated region
    $region2: #{tpu_custom_call.1} parent=1 // pred_check
      _
    $region3: #{tpu_custom_call.1} parent=1 // pred_check_branch
      %18 = sbr.rel (0) target = $region5
    $region4: #{tpu_custom_call.1} parent=1 // pred_region
      %20 = vsyncadd [#allocation5], 0
      %s21 = sshll.u32 %s0, 4
      %s22 = int_to_ptr.hbm [resolvable:$true] %s21
      %s23 = sshll.u32 [#allocation4], 4
      %s24 = int_to_ptr.vmem [resolvable:$true] %s23
      %29 = dma.hbm_to_vmem [thread:$0]  %s22, 1024, %s24, [#allocation5], 128, 128, 8
    $region5: #{tpu_custom_call.1} parent=1 // pred_fallthru
      _
    // Predicated region
    $region6: #{tpu_custom_call.1} parent=1 // pred_check
      _
    $region7: #{tpu_custom_call.1} parent=1 // pred_check_branch
      %31 = sbr.rel (0) target = $region9
    $region8: #{tpu_custom_call.1} parent=1 // pred_region
      %33 = vsyncadd [#allocation7], 0
      %s34 = sshll.u32 %s1, 4
      %s35 = int_to_ptr.hbm [resolvable:$true] %s34
      %s36 = sshll.u32 [#allocation6], 4
      %s37 = int_to_ptr.vmem [resolvable:$true] %s36
      %42 = dma.hbm_to_vmem [thread:$0]  %s35, 1024, %s37, [#allocation7], 128, 128, 8
    $region9: #{tpu_custom_call.1} parent=1 // pred_fallthru
      _
    // Predicated region
    $region10: #{tpu_custom_call.1} parent=1 // pred_check
      _
    $region11: #{tpu_custom_call.1} parent=1 // pred_check_branch
      %44 = sbr.rel (0) target = $region13
    $region12: #{tpu_custom_call.1} parent=1 // pred_region
      %46 = vsyncadd [#allocation7], 0
      %s47 = sshll.u32 %s2, 4
      %s48 = int_to_ptr.hbm [resolvable:$true] %s47
      %s49 = sshll.u32 [#allocation8], 4
      %s50 = int_to_ptr.vmem [resolvable:$true] %s49
      %55 = dma.hbm_to_vmem [thread:$0]  %s48, 2048, %s50, [#allocation7], 512, 512, 32
    $region13: #{tpu_custom_call.1} parent=1 // pred_fallthru
      _
    // Predicated region
    $region14: #{tpu_custom_call.1} parent=1 // pred_check
      _
    $region15: #{tpu_custom_call.1} parent=1 // pred_check_branch
      %57 = sbr.rel (0) target = $region17
    $region16: #{tpu_custom_call.1} parent=1 // pred_region
      %59 = vsyncadd [#allocation10], 0
      %s60 = sshll.u32 %s3, 4
      %s61 = int_to_ptr.hbm [resolvable:$true] %s60
      %s62 = sshll.u32 [#allocation9], 4
      %s63 = int_to_ptr.vmem [resolvable:$true] %s62
      %68 = dma.hbm_to_vmem [thread:$0]  %s61, 8192, %s63, [#allocation10], 512, 512, 32
    $region17: #{tpu_custom_call.1} parent=1 // pred_fallthru
      _
    // Predicated region
    $region18: #{tpu_custom_call.1} parent=1 // pred_check
      _
    $region19: #{tpu_custom_call.1} parent=1 // pred_check_branch
      %70 = sbr.rel (0) target = $region21
    $region20: #{tpu_custom_call.1} parent=1 // pred_region
      _
    $region21: #{tpu_custom_call.1} parent=1 // pred_fallthru
      _
    // Predicated region
    $region22: #{tpu_custom_call.1} parent=1 // pred_check
      _
    $region23: #{tpu_custom_call.1} parent=1 // pred_check_branch
      %72 = sbr.rel (0) target = $region25
    $region24: #{tpu_custom_call.1} parent=1 // pred_region
      _
    $region25: #{tpu_custom_call.1} parent=1 // pred_fallthru
      _
    // Predicated region
    $region26: #{tpu_custom_call.1} parent=1 // pred_check
      _
    $region27: #{tpu_custom_call.1} parent=1 // pred_check_branch
      %74 = sbr.rel (0) target = $region29
    $region28: #{tpu_custom_call.1} parent=1 // pred_region
      _
    $region29: #{tpu_custom_call.1} parent=1 // pred_fallthru
      _
    // Predicated region
    $region30: #{tpu_custom_call.1} parent=1 // pred_check
      _
    $region31: #{tpu_custom_call.1} parent=1 // pred_check_branch
      %76 = sbr.rel (0) target = $region33
    $region32: #{tpu_custom_call.1} parent=1 // pred_region
      %78 = dma.done [#allocation5], 1024
    $region33: #{tpu_custom_call.1} parent=1 // pred_fallthru
      _
    // Predicated region
    $region34: #{tpu_custom_call.1} parent=1 // pred_check
      _
    $region35: #{tpu_custom_call.1} parent=1 // pred_check_branch
      %80 = sbr.rel (0) target = $region37
    $region36: #{tpu_custom_call.1} parent=1 // pred_region
      %82 = dma.done [#allocation7], 1024
    $region37: #{tpu_custom_call.1} parent=1 // pred_fallthru
      _
    // Predicated region
    $region38: #{tpu_custom_call.1} parent=1 // pred_check
      _
    $region39: #{tpu_custom_call.1} parent=1 // pred_check_branch
      %84 = sbr.rel (0) target = $region41
    $region40: #{tpu_custom_call.1} parent=1 // pred_region
      %86 = dma.done [#allocation7], 2048
    $region41: #{tpu_custom_call.1} parent=1 // pred_fallthru
      _
    // Predicated region
    $region42: #{tpu_custom_call.1} parent=1 // pred_check
      _
    $region43: #{tpu_custom_call.1} parent=1 // pred_check_branch
      %88 = sbr.rel (0) target = $region45
    $region44: #{tpu_custom_call.1} parent=1 // pred_region
      %90 = dma.done [#allocation10], 8192
    $region45: #{tpu_custom_call.1} parent=1 // pred_fallthru
      _
    %v91 = vld [vmem:[#allocation4] sm:$0xff]
    %v92 = vld [vmem:[#allocation4 + $0x8] sm:$0xff]
    %v93 = vld [vmem:[#allocation4 + $0x10] sm:$0xff]
    %v94 = vld [vmem:[#allocation4 + $0x18] sm:$0xff]
    %v95 = vld [vmem:[#allocation4 + $0x20] sm:$0xff]
    %v96 = vld [vmem:[#allocation4 + $0x28] sm:$0xff]
    %v97 = vld [vmem:[#allocation4 + $0x30] sm:$0xff]
    %v98 = vld [vmem:[#allocation4 + $0x38] sm:$0xff]
    %v99 = vld [vmem:[#allocation8] sm:$0xff]
    %v100 = vld [vmem:[#allocation8 + $0x8] sm:$0xff]
    %v101 = vld [vmem:[#allocation8 + $0x10] sm:$0xff]
    %v102 = vld [vmem:[#allocation8 + $0x18] sm:$0xff]
    %v103 = vld [vmem:[#allocation8 + $0x20] sm:$0xff]
    %v104 = vld [vmem:[#allocation8 + $0x28] sm:$0xff]
    %v105 = vld [vmem:[#allocation8 + $0x30] sm:$0xff]
    %v106 = vld [vmem:[#allocation8 + $0x38] sm:$0xff]
    %v107 = vld [vmem:[#allocation8 + $0x40] sm:$0xff]
    %v108 = vld [vmem:[#allocation8 + $0x48] sm:$0xff]
    %v109 = vld [vmem:[#allocation8 + $0x50] sm:$0xff]
    %v110 = vld [vmem:[#allocation8 + $0x58] sm:$0xff]
    %v111 = vld [vmem:[#allocation8 + $0x60] sm:$0xff]
    %v112 = vld [vmem:[#allocation8 + $0x68] sm:$0xff]
    %v113 = vld [vmem:[#allocation8 + $0x70] sm:$0xff]
    %v114 = vld [vmem:[#allocation8 + $0x78] sm:$0xff]
    %v115 = vld [vmem:[%s4] sm:$0xf]
    %v117 = vperm.slane %v115, 0
    %v118 = vperm.slane %v115, 1
    %v119 = vperm.slane %v115, 2
    %v120 = vperm.slane %v115, 3
    %vm125 = vcmask 261120
    %v127 = vsel %vm125, %v91, 0
    %v130 = vsel %vm125, %v92, 0
    %v133 = vsel %vm125, %v93, 0
    %v136 = vsel %vm125, %v94, 0
    %v139 = vsel %vm125, %v95, 0
    %v142 = vsel %vm125, %v96, 0
    %v145 = vsel %vm125, %v97, 0
    %v148 = vsel %vm125, %v98, 0
    %150 = vmatpush.msra.mxu0 0.0
    %151 = vmatpush.msra.mxu0 0.0
    %152 = vmatpush.msra.mxu0 0.0
    %153 = vmatpush.msra.mxu0 0.0
    %154 = vmatpush.msra.mxu0 0.0
    %155 = vmatpush.msra.mxu0 0.0
    %156 = vmatpush.msra.mxu0 0.0
    %157 = vmatpush.msra.mxu0 0.0
    %158 = vmatpush.msra.mxu0 0.0
    %159 = vmatpush.msra.mxu0 0.0
    %160 = vmatpush.msra.mxu0 0.0
    %161 = vmatpush.msra.mxu0 0.0
    %162 = vmatpush.msra.mxu0 %v111
    %163 = vmatpush.msra.mxu0 %v107
    %164 = vmatpush.msra.mxu0 %v103
    %165 = vmatpush.msra.mxu0 %v99
    %166 = vmatmul.f32.gmra.mxu0 %v127
    %v167 = vpop.f32.mrf.mxu0
    %v168 = vadd.f32 %v117, %v167
    %169 = vmatmul.f32.gmra.mxu0 %v130
    %v170 = vpop.f32.mrf.mxu0
    %v171 = vadd.f32 %v117, %v170
    %172 = vmatmul.f32.gmra.mxu0 %v133
    %v173 = vpop.f32.mrf.mxu0
    %v174 = vadd.f32 %v117, %v173
    %175 = vmatmul.f32.gmra.mxu0 %v136
    %v176 = vpop.f32.mrf.mxu0
    %v177 = vadd.f32 %v117, %v176
    %178 = vmatmul.f32.gmra.mxu0 %v139
    %v179 = vpop.f32.mrf.mxu0
    %v180 = vadd.f32 %v117, %v179
    %181 = vmatmul.f32.gmra.mxu0 %v142
    %v182 = vpop.f32.mrf.mxu0
    %v183 = vadd.f32 %v117, %v182
    %184 = vmatmul.f32.gmra.mxu0 %v145
    %v185 = vpop.f32.mrf.mxu0
    %v186 = vadd.f32 %v117, %v185
    %187 = vmatmul.f32.gmra.mxu0 %v148
    %v188 = vpop.f32.mrf.mxu0
    %v189 = vadd.f32 %v117, %v188
    %190 = vdwg.mxu0
    %191 = vmatpush.msra.mxu0 0.0
    %192 = vmatpush.msra.mxu0 0.0
    %193 = vmatpush.msra.mxu0 0.0
    %194 = vmatpush.msra.mxu0 0.0
    %195 = vmatpush.msra.mxu0 0.0
    %196 = vmatpush.msra.mxu0 0.0
    %197 = vmatpush.msra.mxu0 0.0
    %198 = vmatpush.msra.mxu0 0.0
    %199 = vmatpush.msra.mxu0 0.0
    %200 = vmatpush.msra.mxu0 0.0
    %201 = vmatpush.msra.mxu0 0.0
    %202 = vmatpush.msra.mxu0 0.0
    %203 = vmatpush.msra.mxu0 %v112
    %204 = vmatpush.msra.mxu0 %v108
    %205 = vmatpush.msra.mxu0 %v104
    %206 = vmatpush.msra.mxu0 %v100
    %207 = vmatmul.f32.gmra.mxu0 %v127
    %v208 = vpop.f32.mrf.mxu0
    %v209 = vadd.f32 %v118, %v208
    %210 = vmatmul.f32.gmra.mxu0 %v130
    %v211 = vpop.f32.mrf.mxu0
    %v212 = vadd.f32 %v118, %v211
    %213 = vmatmul.f32.gmra.mxu0 %v133
    %v214 = vpop.f32.mrf.mxu0
    %v215 = vadd.f32 %v118, %v214
    %216 = vmatmul.f32.gmra.mxu0 %v136
    %v217 = vpop.f32.mrf.mxu0
    %v218 = vadd.f32 %v118, %v217
    %219 = vmatmul.f32.gmra.mxu0 %v139
    %v220 = vpop.f32.mrf.mxu0
    %v221 = vadd.f32 %v118, %v220
    %222 = vmatmul.f32.gmra.mxu0 %v142
    %v223 = vpop.f32.mrf.mxu0
    %v224 = vadd.f32 %v118, %v223
    %225 = vmatmul.f32.gmra.mxu0 %v145
    %v226 = vpop.f32.mrf.mxu0
    %v227 = vadd.f32 %v118, %v226
    %228 = vmatmul.f32.gmra.mxu0 %v148
    %v229 = vpop.f32.mrf.mxu0
    %v230 = vadd.f32 %v118, %v229
    %231 = vdwg.mxu0
    %232 = vmatpush.msra.mxu0 0.0
    %233 = vmatpush.msra.mxu0 0.0
    %234 = vmatpush.msra.mxu0 0.0
    %235 = vmatpush.msra.mxu0 0.0
    %236 = vmatpush.msra.mxu0 0.0
    %237 = vmatpush.msra.mxu0 0.0
    %238 = vmatpush.msra.mxu0 0.0
    %239 = vmatpush.msra.mxu0 0.0
    %240 = vmatpush.msra.mxu0 0.0
    %241 = vmatpush.msra.mxu0 0.0
    %242 = vmatpush.msra.mxu0 0.0
    %243 = vmatpush.msra.mxu0 0.0
    %244 = vmatpush.msra.mxu0 %v113
    %245 = vmatpush.msra.mxu0 %v109
    %246 = vmatpush.msra.mxu0 %v105
    %247 = vmatpush.msra.mxu0 %v101
    %248 = vmatmul.f32.gmra.mxu0 %v127
    %v249 = vpop.f32.mrf.mxu0
    %v250 = vadd.f32 %v119, %v249
    %251 = vmatmul.f32.gmra.mxu0 %v130
    %v252 = vpop.f32.mrf.mxu0
    %v253 = vadd.f32 %v119, %v252
    %254 = vmatmul.f32.gmra.mxu0 %v133
    %v255 = vpop.f32.mrf.mxu0
    %v256 = vadd.f32 %v119, %v255
    %257 = vmatmul.f32.gmra.mxu0 %v136
    %v258 = vpop.f32.mrf.mxu0
    %v259 = vadd.f32 %v119, %v258
    %260 = vmatmul.f32.gmra.mxu0 %v139
    %v261 = vpop.f32.mrf.mxu0
    %v262 = vadd.f32 %v119, %v261
    %263 = vmatmul.f32.gmra.mxu0 %v142
    %v264 = vpop.f32.mrf.mxu0
    %v265 = vadd.f32 %v119, %v264
    %266 = vmatmul.f32.gmra.mxu0 %v145
    %v267 = vpop.f32.mrf.mxu0
    %v268 = vadd.f32 %v119, %v267
    %269 = vmatmul.f32.gmra.mxu0 %v148
    %v270 = vpop.f32.mrf.mxu0
    %v271 = vadd.f32 %v119, %v270
    %272 = vdwg.mxu0
    %273 = vmatpush.msra.mxu0 0.0
    %274 = vmatpush.msra.mxu0 0.0
    %275 = vmatpush.msra.mxu0 0.0
    %276 = vmatpush.msra.mxu0 0.0
    %277 = vmatpush.msra.mxu0 0.0
    %278 = vmatpush.msra.mxu0 0.0
    %279 = vmatpush.msra.mxu0 0.0
    %280 = vmatpush.msra.mxu0 0.0
    %281 = vmatpush.msra.mxu0 0.0
    %282 = vmatpush.msra.mxu0 0.0
    %283 = vmatpush.msra.mxu0 0.0
    %284 = vmatpush.msra.mxu0 0.0
    %285 = vmatpush.msra.mxu0 %v114
    %286 = vmatpush.msra.mxu0 %v110
    %287 = vmatpush.msra.mxu0 %v106
    %288 = vmatpush.msra.mxu0 %v102
    %289 = vmatmul.f32.gmra.mxu0 %v127
    %v290 = vpop.f32.mrf.mxu0
    %v291 = vadd.f32 %v120, %v290
    %292 = vmatmul.f32.gmra.mxu0 %v130
    %v293 = vpop.f32.mrf.mxu0
    %v294 = vadd.f32 %v120, %v293
    %295 = vmatmul.f32.gmra.mxu0 %v133
    %v296 = vpop.f32.mrf.mxu0
    %v297 = vadd.f32 %v120, %v296
    %298 = vmatmul.f32.gmra.mxu0 %v136
    %v299 = vpop.f32.mrf.mxu0
    %v300 = vadd.f32 %v120, %v299
    %301 = vmatmul.f32.gmra.mxu0 %v139
    %v302 = vpop.f32.mrf.mxu0
    %v303 = vadd.f32 %v120, %v302
    %304 = vmatmul.f32.gmra.mxu0 %v142
    %v305 = vpop.f32.mrf.mxu0
    %v306 = vadd.f32 %v120, %v305
    %307 = vmatmul.f32.gmra.mxu0 %v145
    %v308 = vpop.f32.mrf.mxu0
    %v309 = vadd.f32 %v120, %v308
    %310 = vmatmul.f32.gmra.mxu0 %v148
    %v311 = vpop.f32.mrf.mxu0
    %v312 = vadd.f32 %v120, %v311
    %313 = vdwg.mxu0
    %314 = vst [vmem:[#allocation2] sm:$0xff] %v168
    %315 = vst [vmem:[#allocation2 + $0x8] sm:$0xff] %v209
    %316 = vst [vmem:[#allocation2 + $0x10] sm:$0xff] %v250
    %317 = vst [vmem:[#allocation2 + $0x18] sm:$0xff] %v291
    %318 = vst [vmem:[#allocation2 + $0x20] sm:$0xff] %v171
    %319 = vst [vmem:[#allocation2 + $0x28] sm:$0xff] %v212
    %320 = vst [vmem:[#allocation2 + $0x30] sm:$0xff] %v253
    %321 = vst [vmem:[#allocation2 + $0x38] sm:$0xff] %v294
    %322 = vst [vmem:[#allocation2 + $0x40] sm:$0xff] %v174
    %323 = vst [vmem:[#allocation2 + $0x48] sm:$0xff] %v215
    %324 = vst [vmem:[#allocation2 + $0x50] sm:$0xff] %v256
    %325 = vst [vmem:[#allocation2 + $0x58] sm:$0xff] %v297
    %326 = vst [vmem:[#allocation2 + $0x60] sm:$0xff] %v177
    %327 = vst [vmem:[#allocation2 + $0x68] sm:$0xff] %v218
    %328 = vst [vmem:[#allocation2 + $0x70] sm:$0xff] %v259
    %329 = vst [vmem:[#allocation2 + $0x78] sm:$0xff] %v300
    %330 = vst [vmem:[#allocation2 + $0x80] sm:$0xff] %v180
    %331 = vst [vmem:[#allocation2 + $0x88] sm:$0xff] %v221
    %332 = vst [vmem:[#allocation2 + $0x90] sm:$0xff] %v262
    %333 = vst [vmem:[#allocation2 + $0x98] sm:$0xff] %v303
    %334 = vst [vmem:[#allocation2 + $0xa0] sm:$0xff] %v183
    %335 = vst [vmem:[#allocation2 + $0xa8] sm:$0xff] %v224
    %336 = vst [vmem:[#allocation2 + $0xb0] sm:$0xff] %v265
    %337 = vst [vmem:[#allocation2 + $0xb8] sm:$0xff] %v306
    %338 = vst [vmem:[#allocation2 + $0xc0] sm:$0xff] %v186
    %339 = vst [vmem:[#allocation2 + $0xc8] sm:$0xff] %v227
    %340 = vst [vmem:[#allocation2 + $0xd0] sm:$0xff] %v268
    %341 = vst [vmem:[#allocation2 + $0xd8] sm:$0xff] %v309
    %342 = vst [vmem:[#allocation2 + $0xe0] sm:$0xff] %v189
    %343 = vst [vmem:[#allocation2 + $0xe8] sm:$0xff] %v230
    %344 = vst [vmem:[#allocation2 + $0xf0] sm:$0xff] %v271
    %345 = vst [vmem:[#allocation2 + $0xf8] sm:$0xff] %v312
    %v346 = vld [vmem:[#allocation2] sm:$0xff]
    %v347 = vld [vmem:[#allocation2 + $0x8] sm:$0xff]
    %v348 = vld [vmem:[#allocation2 + $0x10] sm:$0xff]
    %v349 = vld [vmem:[#allocation2 + $0x18] sm:$0xff]
    %v350 = vld [vmem:[#allocation9] sm:$0xff]
    %v351 = vld [vmem:[#allocation9 + $0x8] sm:$0xff]
    %v352 = vld [vmem:[#allocation9 + $0x10] sm:$0xff]
    %v353 = vld [vmem:[#allocation9 + $0x18] sm:$0xff]
    %v354 = vld [vmem:[#allocation9 + $0x20] sm:$0xff]
    %v355 = vld [vmem:[#allocation9 + $0x28] sm:$0xff]
    %v356 = vld [vmem:[#allocation9 + $0x30] sm:$0xff]
    %v357 = vld [vmem:[#allocation9 + $0x38] sm:$0xff]
    %v358 = vld [vmem:[#allocation9 + $0x40] sm:$0xff]
    %v359 = vld [vmem:[#allocation9 + $0x48] sm:$0xff]
    %v360 = vld [vmem:[#allocation9 + $0x50] sm:$0xff]
    %v361 = vld [vmem:[#allocation9 + $0x58] sm:$0xff]
    %v362 = vld [vmem:[#allocation9 + $0x60] sm:$0xff]
    %v363 = vld [vmem:[#allocation9 + $0x68] sm:$0xff]
    %v364 = vld [vmem:[#allocation9 + $0x70] sm:$0xff]
    %v365 = vld [vmem:[#allocation9 + $0x78] sm:$0xff]
    %v366 = vld [vmem:[#allocation9 + $0x80] sm:$0xff]
    %v367 = vld [vmem:[#allocation9 + $0x88] sm:$0xff]
    %v368 = vld [vmem:[#allocation9 + $0x90] sm:$0xff]
    %v369 = vld [vmem:[#allocation9 + $0x98] sm:$0xff]
    %v370 = vld [vmem:[#allocation9 + $0xa0] sm:$0xff]
    %v371 = vld [vmem:[#allocation9 + $0xa8] sm:$0xff]
    %v372 = vld [vmem:[#allocation9 + $0xb0] sm:$0xff]
    %v373 = vld [vmem:[#allocation9 + $0xb8] sm:$0xff]
    %v374 = vld [vmem:[#allocation9 + $0xc0] sm:$0xff]
    %v375 = vld [vmem:[#allocation9 + $0xc8] sm:$0xff]
    %v376 = vld [vmem:[#allocation9 + $0xd0] sm:$0xff]
    %v377 = vld [vmem:[#allocation9 + $0xd8] sm:$0xff]
    %v378 = vld [vmem:[#allocation9 + $0xe0] sm:$0xff]
    %v379 = vld [vmem:[#allocation9 + $0xe8] sm:$0xff]
    %v380 = vld [vmem:[#allocation9 + $0xf0] sm:$0xff]
    %v381 = vld [vmem:[#allocation9 + $0xf8] sm:$0xff]
    %v382 = vld [vmem:[#allocation9 + $0x100] sm:$0xff]
    %v383 = vld [vmem:[#allocation9 + $0x108] sm:$0xff]
    %v384 = vld [vmem:[#allocation9 + $0x110] sm:$0xff]
    %v385 = vld [vmem:[#allocation9 + $0x118] sm:$0xff]
    %v386 = vld [vmem:[#allocation9 + $0x120] sm:$0xff]
    %v387 = vld [vmem:[#allocation9 + $0x128] sm:$0xff]
    %v388 = vld [vmem:[#allocation9 + $0x130] sm:$0xff]
    %v389 = vld [vmem:[#allocation9 + $0x138] sm:$0xff]
    %v390 = vld [vmem:[#allocation9 + $0x140] sm:$0xff]
    %v391 = vld [vmem:[#allocation9 + $0x148] sm:$0xff]
    %v392 = vld [vmem:[#allocation9 + $0x150] sm:$0xff]
    %v393 = vld [vmem:[#allocation9 + $0x158] sm:$0xff]
    %v394 = vld [vmem:[#allocation9 + $0x160] sm:$0xff]
    %v395 = vld [vmem:[#allocation9 + $0x168] sm:$0xff]
    %v396 = vld [vmem:[#allocation9 + $0x170] sm:$0xff]
    %v397 = vld [vmem:[#allocation9 + $0x178] sm:$0xff]
    %v398 = vld [vmem:[#allocation9 + $0x180] sm:$0xff]
    %v399 = vld [vmem:[#allocation9 + $0x188] sm:$0xff]
    %v400 = vld [vmem:[#allocation9 + $0x190] sm:$0xff]
    %v401 = vld [vmem:[#allocation9 + $0x198] sm:$0xff]
    %v402 = vld [vmem:[#allocation9 + $0x1a0] sm:$0xff]
    %v403 = vld [vmem:[#allocation9 + $0x1a8] sm:$0xff]
    %v404 = vld [vmem:[#allocation9 + $0x1b0] sm:$0xff]
    %v405 = vld [vmem:[#allocation9 + $0x1b8] sm:$0xff]
    %v406 = vld [vmem:[#allocation9 + $0x1c0] sm:$0xff]
    %v407 = vld [vmem:[#allocation9 + $0x1c8] sm:$0xff]
    %v408 = vld [vmem:[#allocation9 + $0x1d0] sm:$0xff]
    %v409 = vld [vmem:[#allocation9 + $0x1d8] sm:$0xff]
    %v410 = vld [vmem:[#allocation9 + $0x1e0] sm:$0xff]
    %v411 = vld [vmem:[#allocation9 + $0x1e8] sm:$0xff]
    %v412 = vld [vmem:[#allocation9 + $0x1f0] sm:$0xff]
    %v413 = vld [vmem:[#allocation9 + $0x1f8] sm:$0xff]
    %414 = vmatpush.msra.mxu0 %v410
    %415 = vmatpush.msra.mxu0 %v406
    %416 = vmatpush.msra.mxu0 %v402
    %417 = vmatpush.msra.mxu0 %v398
    %418 = vmatpush.msra.mxu0 %v394
    %419 = vmatpush.msra.mxu0 %v390
    %420 = vmatpush.msra.mxu0 %v386
    %421 = vmatpush.msra.mxu0 %v382
    %422 = vmatpush.msra.mxu0 %v378
    %423 = vmatpush.msra.mxu0 %v374
    %424 = vmatpush.msra.mxu0 %v370
    %425 = vmatpush.msra.mxu0 %v366
    %426 = vmatpush.msra.mxu0 %v362
    %427 = vmatpush.msra.mxu0 %v358
    %428 = vmatpush.msra.mxu0 %v354
    %429 = vmatpush.msra.mxu0 %v350
    %430 = vmatmul.f32.gmra.mxu0 0.0
    %v431 = vpop.f32.mrf.mxu0
    %v432 = vadd.f32 0.0, %v431
    %433 = vdwg.mxu0
    %434 = vmatpush.msra.mxu0 %v411
    %435 = vmatpush.msra.mxu0 %v407
    %436 = vmatpush.msra.mxu0 %v403
    %437 = vmatpush.msra.mxu0 %v399
    %438 = vmatpush.msra.mxu0 %v395
    %439 = vmatpush.msra.mxu0 %v391
    %440 = vmatpush.msra.mxu0 %v387
    %441 = vmatpush.msra.mxu0 %v383
    %442 = vmatpush.msra.mxu0 %v379
    %443 = vmatpush.msra.mxu0 %v375
    %444 = vmatpush.msra.mxu0 %v371
    %445 = vmatpush.msra.mxu0 %v367
    %446 = vmatpush.msra.mxu0 %v363
    %447 = vmatpush.msra.mxu0 %v359
    %448 = vmatpush.msra.mxu0 %v355
    %449 = vmatpush.msra.mxu0 %v351
    %450 = vmatmul.f32.gmra.mxu0 0.0
    %v451 = vpop.f32.mrf.mxu0
    %v452 = vadd.f32 0.0, %v451
    %453 = vdwg.mxu0
    %454 = vmatpush.msra.mxu0 %v412
    %455 = vmatpush.msra.mxu0 %v408
    %456 = vmatpush.msra.mxu0 %v404
    %457 = vmatpush.msra.mxu0 %v400
    %458 = vmatpush.msra.mxu0 %v396
    %459 = vmatpush.msra.mxu0 %v392
    %460 = vmatpush.msra.mxu0 %v388
    %461 = vmatpush.msra.mxu0 %v384
    %462 = vmatpush.msra.mxu0 %v380
    %463 = vmatpush.msra.mxu0 %v376
    %464 = vmatpush.msra.mxu0 %v372
    %465 = vmatpush.msra.mxu0 %v368
    %466 = vmatpush.msra.mxu0 %v364
    %467 = vmatpush.msra.mxu0 %v360
    %468 = vmatpush.msra.mxu0 %v356
    %469 = vmatpush.msra.mxu0 %v352
    %470 = vmatmul.f32.gmra.mxu0 0.0
    %v471 = vpop.f32.mrf.mxu0
    %v472 = vadd.f32 0.0, %v471
    %473 = vdwg.mxu0
    %474 = vmatpush.msra.mxu0 %v413
    %475 = vmatpush.msra.mxu0 %v409
    %476 = vmatpush.msra.mxu0 %v405
    %477 = vmatpush.msra.mxu0 %v401
    %478 = vmatpush.msra.mxu0 %v397
    %479 = vmatpush.msra.mxu0 %v393
    %480 = vmatpush.msra.mxu0 %v389
    %481 = vmatpush.msra.mxu0 %v385
    %482 = vmatpush.msra.mxu0 %v381
    %483 = vmatpush.msra.mxu0 %v377
    %484 = vmatpush.msra.mxu0 %v373
    %485 = vmatpush.msra.mxu0 %v369
    %486 = vmatpush.msra.mxu0 %v365
    %487 = vmatpush.msra.mxu0 %v361
    %488 = vmatpush.msra.mxu0 %v357
    %489 = vmatpush.msra.mxu0 %v353
    %490 = vmatmul.f32.gmra.mxu0 0.0
    %v491 = vpop.f32.mrf.mxu0
    %v492 = vadd.f32 0.0, %v491
    %493 = vdwg.mxu0
    %v494 = vadd.f32 %v346, %v432
    %v495 = vadd.f32 %v347, %v452
    %v496 = vadd.f32 %v348, %v472
    %v497 = vadd.f32 %v349, %v492
    %v498 = vxor.u32 %v494, 2147483648
    %v499 = vmul.f32 %v498, 1.442695
    %v500 = vpow.pop %v499
    %v501 = vadd.f32 %v500, 1.0
    %v502 = vrcp.pop %v501
    %v503 = vmul.f32 %v501, %v502
    %v504 = vsub.f32 1.0, %v503
    %v505 = vmul.f32 %v502, %v504
    %v506 = vadd.f32 %v502, %v505
    %vm507 = vweird.f32 %v501
    %vm508 = vweird.f32 %v502
    %vm509 = vmor %vm507, %vm508
    %v510 = vsel %vm509, %v502, %v506
    %v511 = vand.u32 2147483647, %v501
    %vm512 = vcmp.eq.f32.partialorder %v511, 8.507059e+37
    %v513 = vand.u32 %v501, 2147483648
    %v514 = vor.u32 1.1754944e-38, %v513
    %v515 = vsel %vm512, %v514, %v510
    %v516 = vmul.f32 1.0, %v515
    %v517 = vxor.u32 %v495, 2147483648
    %v518 = vmul.f32 %v517, 1.442695
    %v519 = vpow.pop %v518
    %v520 = vadd.f32 %v519, 1.0
    %v521 = vrcp.pop %v520
    %v522 = vmul.f32 %v520, %v521
    %v523 = vsub.f32 1.0, %v522
    %v524 = vmul.f32 %v521, %v523
    %v525 = vadd.f32 %v521, %v524
    %vm526 = vweird.f32 %v520
    %vm527 = vweird.f32 %v521
    %vm528 = vmor %vm526, %vm527
    %v529 = vsel %vm528, %v521, %v525
    %v530 = vand.u32 2147483647, %v520
    %vm531 = vcmp.eq.f32.partialorder %v530, 8.507059e+37
    %v532 = vand.u32 %v520, 2147483648
    %v533 = vor.u32 1.1754944e-38, %v532
    %v534 = vsel %vm531, %v533, %v529
    %v535 = vmul.f32 1.0, %v534
    %v536 = vtanh.pop %v496
    %v537 = vxor.u32 %v497, 2147483648
    %v538 = vmul.f32 %v537, 1.442695
    %v539 = vpow.pop %v538
    %v540 = vadd.f32 %v539, 1.0
    %v541 = vrcp.pop %v540
    %v542 = vmul.f32 %v540, %v541
    %v543 = vsub.f32 1.0, %v542
    %v544 = vmul.f32 %v541, %v543
    %v545 = vadd.f32 %v541, %v544
    %vm546 = vweird.f32 %v540
    %vm547 = vweird.f32 %v541
    %vm548 = vmor %vm546, %vm547
    %v549 = vsel %vm548, %v541, %v545
    %v550 = vand.u32 2147483647, %v540
    %vm551 = vcmp.eq.f32.partialorder %v550, 8.507059e+37
    %v552 = vand.u32 %v540, 2147483648
    %v553 = vor.u32 1.1754944e-38, %v552
    %v554 = vsel %vm551, %v553, %v549
    %v555 = vmul.f32 1.0, %v554
    %v556 = vmul.f32 %v535, 0.0
    %v557 = vmul.f32 %v516, %v536
    %v558 = vadd.f32 %v556, %v557
    %v559 = vtanh.pop %v558
    %v560 = vmul.f32 %v555, %v559
    %v561 = vld [vmem:[#allocation6] sm:$0xff]
    %v562 = vmul.f32 %v561, %v560
    %v563 = vadd.f32 %v562, 0.0
    %v564 = vld [vmem:[#allocation2 + $0x20] sm:$0xff]
    %v565 = vld [vmem:[#allocation2 + $0x28] sm:$0xff]
    %v566 = vld [vmem:[#allocation2 + $0x30] sm:$0xff]
    %v567 = vld [vmem:[#allocation2 + $0x38] sm:$0xff]
    %568 = vmatpush.msra.mxu0 %v410
    %569 = vmatpush.msra.mxu0 %v406
    %570 = vmatpush.msra.mxu0 %v402
    %571 = vmatpush.msra.mxu0 %v398
    %572 = vmatpush.msra.mxu0 %v394
    %573 = vmatpush.msra.mxu0 %v390
    %574 = vmatpush.msra.mxu0 %v386
    %575 = vmatpush.msra.mxu0 %v382
    %576 = vmatpush.msra.mxu0 %v378
    %577 = vmatpush.msra.mxu0 %v374
    %578 = vmatpush.msra.mxu0 %v370
    %579 = vmatpush.msra.mxu0 %v366
    %580 = vmatpush.msra.mxu0 %v362
    %581 = vmatpush.msra.mxu0 %v358
    %582 = vmatpush.msra.mxu0 %v354
    %583 = vmatpush.msra.mxu0 %v350
    %584 = vmatmul.f32.gmra.mxu0 %v560
    %v585 = vpop.f32.mrf.mxu0
    %v586 = vadd.f32 0.0, %v585
    %587 = vdwg.mxu0
    %588 = vmatpush.msra.mxu0 %v411
    %589 = vmatpush.msra.mxu0 %v407
    %590 = vmatpush.msra.mxu0 %v403
    %591 = vmatpush.msra.mxu0 %v399
    %592 = vmatpush.msra.mxu0 %v395
    %593 = vmatpush.msra.mxu0 %v391
    %594 = vmatpush.msra.mxu0 %v387
    %595 = vmatpush.msra.mxu0 %v383
    %596 = vmatpush.msra.mxu0 %v379
    %597 = vmatpush.msra.mxu0 %v375
    %598 = vmatpush.msra.mxu0 %v371
    %599 = vmatpush.msra.mxu0 %v367
    %600 = vmatpush.msra.mxu0 %v363
    %601 = vmatpush.msra.mxu0 %v359
    %602 = vmatpush.msra.mxu0 %v355
    %603 = vmatpush.msra.mxu0 %v351
    %604 = vmatmul.f32.gmra.mxu0 %v560
    %v605 = vpop.f32.mrf.mxu0
    %v606 = vadd.f32 0.0, %v605
    %607 = vdwg.mxu0
    %608 = vmatpush.msra.mxu0 %v412
    %609 = vmatpush.msra.mxu0 %v408
    %610 = vmatpush.msra.mxu0 %v404
    %611 = vmatpush.msra.mxu0 %v400
    %612 = vmatpush.msra.mxu0 %v396
    %613 = vmatpush.msra.mxu0 %v392
    %614 = vmatpush.msra.mxu0 %v388
    %615 = vmatpush.msra.mxu0 %v384
    %616 = vmatpush.msra.mxu0 %v380
    %617 = vmatpush.msra.mxu0 %v376
    %618 = vmatpush.msra.mxu0 %v372
    %619 = vmatpush.msra.mxu0 %v368
    %620 = vmatpush.msra.mxu0 %v364
    %621 = vmatpush.msra.mxu0 %v360
    %622 = vmatpush.msra.mxu0 %v356
    %623 = vmatpush.msra.mxu0 %v352
    %624 = vmatmul.f32.gmra.mxu0 %v560
    %v625 = vpop.f32.mrf.mxu0
    %v626 = vadd.f32 0.0, %v625
    %627 = vdwg.mxu0
    %628 = vmatpush.msra.mxu0 %v413
    %629 = vmatpush.msra.mxu0 %v409
    %630 = vmatpush.msra.mxu0 %v405
    %631 = vmatpush.msra.mxu0 %v401
    %632 = vmatpush.msra.mxu0 %v397
    %633 = vmatpush.msra.mxu0 %v393
    %634 = vmatpush.msra.mxu0 %v389
    %635 = vmatpush.msra.mxu0 %v385
    %636 = vmatpush.msra.mxu0 %v381
    %637 = vmatpush.msra.mxu0 %v377
    %638 = vmatpush.msra.mxu0 %v373
    %639 = vmatpush.msra.mxu0 %v369
    %640 = vmatpush.msra.mxu0 %v365
    %641 = vmatpush.msra.mxu0 %v361
    %642 = vmatpush.msra.mxu0 %v357
    %643 = vmatpush.msra.mxu0 %v353
    %644 = vmatmul.f32.gmra.mxu0 %v560
    %v645 = vpop.f32.mrf.mxu0
    %v646 = vadd.f32 0.0, %v645
    %647 = vdwg.mxu0
    %v648 = vadd.f32 %v564, %v586
    %v649 = vadd.f32 %v565, %v606
    %v650 = vadd.f32 %v566, %v626
    %v651 = vadd.f32 %v567, %v646
    %v652 = vxor.u32 %v648, 2147483648
    %v653 = vmul.f32 %v652, 1.442695
    %v654 = vpow.pop %v653
    %v655 = vadd.f32 %v654, 1.0
    %v656 = vrcp.pop %v655
    %v657 = vmul.f32 %v655, %v656
    %v658 = vsub.f32 1.0, %v657
    %v659 = vmul.f32 %v656, %v658
    %v660 = vadd.f32 %v656, %v659
    %vm661 = vweird.f32 %v655
    %vm662 = vweird.f32 %v656
    %vm663 = vmor %vm661, %vm662
    %v664 = vsel %vm663, %v656, %v660
    %v665 = vand.u32 2147483647, %v655
    %vm666 = vcmp.eq.f32.partialorder %v665, 8.507059e+37
    %v667 = vand.u32 %v655, 2147483648
    %v668 = vor.u32 1.1754944e-38, %v667
    %v669 = vsel %vm666, %v668, %v664
    %v670 = vmul.f32 1.0, %v669
    %v671 = vxor.u32 %v649, 2147483648
    %v672 = vmul.f32 %v671, 1.442695
    %v673 = vpow.pop %v672
    %v674 = vadd.f32 %v673, 1.0
    %v675 = vrcp.pop %v674
    %v676 = vmul.f32 %v674, %v675
    %v677 = vsub.f32 1.0, %v676
    %v678 = vmul.f32 %v675, %v677
    %v679 = vadd.f32 %v675, %v678
    %vm680 = vweird.f32 %v674
    %vm681 = vweird.f32 %v675
    %vm682 = vmor %vm680, %vm681
    %v683 = vsel %vm682, %v675, %v679
    %v684 = vand.u32 2147483647, %v674
    %vm685 = vcmp.eq.f32.partialorder %v684, 8.507059e+37
    %v686 = vand.u32 %v674, 2147483648
    %v687 = vor.u32 1.1754944e-38, %v686
    %v688 = vsel %vm685, %v687, %v683
    %v689 = vmul.f32 1.0, %v688
    %v690 = vtanh.pop %v650
    %v691 = vxor.u32 %v651, 2147483648
    %v692 = vmul.f32 %v691, 1.442695
    %v693 = vpow.pop %v692
    %v694 = vadd.f32 %v693, 1.0
    %v695 = vrcp.pop %v694
    %v696 = vmul.f32 %v694, %v695
    %v697 = vsub.f32 1.0, %v696
    %v698 = vmul.f32 %v695, %v697
    %v699 = vadd.f32 %v695, %v698
    %vm700 = vweird.f32 %v694
    %vm701 = vweird.f32 %v695
    %vm702 = vmor %vm700, %vm701
    %v703 = vsel %vm702, %v695, %v699
    %v704 = vand.u32 2147483647, %v694
    %vm705 = vcmp.eq.f32.partialorder %v704, 8.507059e+37
    %v706 = vand.u32 %v694, 2147483648
    %v707 = vor.u32 1.1754944e-38, %v706
    %v708 = vsel %vm705, %v707, %v703
    %v709 = vmul.f32 1.0, %v708
    %v710 = vmul.f32 %v689, %v558
    %v711 = vmul.f32 %v670, %v690
    %v712 = vadd.f32 %v710, %v711
    %v713 = vtanh.pop %v712
    %v714 = vmul.f32 %v709, %v713
    %s715 = scalar_lea.vmem [#allocation6], 8
    %v716 = vld [vmem:[%s715] sm:$0xff]
    %v717 = vmul.f32 %v716, %v714
    %v718 = vadd.f32 %v563, %v717
    %v719 = vld [vmem:[#allocation2 + $0x40] sm:$0xff]
    %v720 = vld [vmem:[#allocation2 + $0x48] sm:$0xff]
    %v721 = vld [vmem:[#allocation2 + $0x50] sm:$0xff]
    %v722 = vld [vmem:[#allocation2 + $0x58] sm:$0xff]
    %723 = vmatpush.msra.mxu0 %v410
    %724 = vmatpush.msra.mxu0 %v406
    %725 = vmatpush.msra.mxu0 %v402
    %726 = vmatpush.msra.mxu0 %v398
    %727 = vmatpush.msra.mxu0 %v394
    %728 = vmatpush.msra.mxu0 %v390
    %729 = vmatpush.msra.mxu0 %v386
    %730 = vmatpush.msra.mxu0 %v382
    %731 = vmatpush.msra.mxu0 %v378
    %732 = vmatpush.msra.mxu0 %v374
    %733 = vmatpush.msra.mxu0 %v370
    %734 = vmatpush.msra.mxu0 %v366
    %735 = vmatpush.msra.mxu0 %v362
    %736 = vmatpush.msra.mxu0 %v358
    %737 = vmatpush.msra.mxu0 %v354
    %738 = vmatpush.msra.mxu0 %v350
    %739 = vmatmul.f32.gmra.mxu0 %v714
    %v740 = vpop.f32.mrf.mxu0
    %v741 = vadd.f32 0.0, %v740
    %742 = vdwg.mxu0
    %743 = vmatpush.msra.mxu0 %v411
    %744 = vmatpush.msra.mxu0 %v407
    %745 = vmatpush.msra.mxu0 %v403
    %746 = vmatpush.msra.mxu0 %v399
    %747 = vmatpush.msra.mxu0 %v395
    %748 = vmatpush.msra.mxu0 %v391
    %749 = vmatpush.msra.mxu0 %v387
    %750 = vmatpush.msra.mxu0 %v383
    %751 = vmatpush.msra.mxu0 %v379
    %752 = vmatpush.msra.mxu0 %v375
    %753 = vmatpush.msra.mxu0 %v371
    %754 = vmatpush.msra.mxu0 %v367
    %755 = vmatpush.msra.mxu0 %v363
    %756 = vmatpush.msra.mxu0 %v359
    %757 = vmatpush.msra.mxu0 %v355
    %758 = vmatpush.msra.mxu0 %v351
    %759 = vmatmul.f32.gmra.mxu0 %v714
    %v760 = vpop.f32.mrf.mxu0
    %v761 = vadd.f32 0.0, %v760
    %762 = vdwg.mxu0
    %763 = vmatpush.msra.mxu0 %v412
    %764 = vmatpush.msra.mxu0 %v408
    %765 = vmatpush.msra.mxu0 %v404
    %766 = vmatpush.msra.mxu0 %v400
    %767 = vmatpush.msra.mxu0 %v396
    %768 = vmatpush.msra.mxu0 %v392
    %769 = vmatpush.msra.mxu0 %v388
    %770 = vmatpush.msra.mxu0 %v384
    %771 = vmatpush.msra.mxu0 %v380
    %772 = vmatpush.msra.mxu0 %v376
    %773 = vmatpush.msra.mxu0 %v372
    %774 = vmatpush.msra.mxu0 %v368
    %775 = vmatpush.msra.mxu0 %v364
    %776 = vmatpush.msra.mxu0 %v360
    %777 = vmatpush.msra.mxu0 %v356
    %778 = vmatpush.msra.mxu0 %v352
    %779 = vmatmul.f32.gmra.mxu0 %v714
    %v780 = vpop.f32.mrf.mxu0
    %v781 = vadd.f32 0.0, %v780
    %782 = vdwg.mxu0
    %783 = vmatpush.msra.mxu0 %v413
    %784 = vmatpush.msra.mxu0 %v409
    %785 = vmatpush.msra.mxu0 %v405
    %786 = vmatpush.msra.mxu0 %v401
    %787 = vmatpush.msra.mxu0 %v397
    %788 = vmatpush.msra.mxu0 %v393
    %789 = vmatpush.msra.mxu0 %v389
    %790 = vmatpush.msra.mxu0 %v385
    %791 = vmatpush.msra.mxu0 %v381
    %792 = vmatpush.msra.mxu0 %v377
    %793 = vmatpush.msra.mxu0 %v373
    %794 = vmatpush.msra.mxu0 %v369
    %795 = vmatpush.msra.mxu0 %v365
    %796 = vmatpush.msra.mxu0 %v361
    %797 = vmatpush.msra.mxu0 %v357
    %798 = vmatpush.msra.mxu0 %v353
    %799 = vmatmul.f32.gmra.mxu0 %v714
    %v800 = vpop.f32.mrf.mxu0
    %v801 = vadd.f32 0.0, %v800
    %802 = vdwg.mxu0
    %v803 = vadd.f32 %v719, %v741
    %v804 = vadd.f32 %v720, %v761
    %v805 = vadd.f32 %v721, %v781
    %v806 = vadd.f32 %v722, %v801
    %v807 = vxor.u32 %v803, 2147483648
    %v808 = vmul.f32 %v807, 1.442695
    %v809 = vpow.pop %v808
    %v810 = vadd.f32 %v809, 1.0
    %v811 = vrcp.pop %v810
    %v812 = vmul.f32 %v810, %v811
    %v813 = vsub.f32 1.0, %v812
    %v814 = vmul.f32 %v811, %v813
    %v815 = vadd.f32 %v811, %v814
    %vm816 = vweird.f32 %v810
    %vm817 = vweird.f32 %v811
    %vm818 = vmor %vm816, %vm817
    %v819 = vsel %vm818, %v811, %v815
    %v820 = vand.u32 2147483647, %v810
    %vm821 = vcmp.eq.f32.partialorder %v820, 8.507059e+37
    %v822 = vand.u32 %v810, 2147483648
    %v823 = vor.u32 1.1754944e-38, %v822
    %v824 = vsel %vm821, %v823, %v819
    %v825 = vmul.f32 1.0, %v824
    %v826 = vxor.u32 %v804, 2147483648
    %v827 = vmul.f32 %v826, 1.442695
    %v828 = vpow.pop %v827
    %v829 = vadd.f32 %v828, 1.0
    %v830 = vrcp.pop %v829
    %v831 = vmul.f32 %v829, %v830
    %v832 = vsub.f32 1.0, %v831
    %v833 = vmul.f32 %v830, %v832
    %v834 = vadd.f32 %v830, %v833
    %vm835 = vweird.f32 %v829
    %vm836 = vweird.f32 %v830
    %vm837 = vmor %vm835, %vm836
    %v838 = vsel %vm837, %v830, %v834
    %v839 = vand.u32 2147483647, %v829
    %vm840 = vcmp.eq.f32.partialorder %v839, 8.507059e+37
    %v841 = vand.u32 %v829, 2147483648
    %v842 = vor.u32 1.1754944e-38, %v841
    %v843 = vsel %vm840, %v842, %v838
    %v844 = vmul.f32 1.0, %v843
    %v845 = vtanh.pop %v805
    %v846 = vxor.u32 %v806, 2147483648
    %v847 = vmul.f32 %v846, 1.442695
    %v848 = vpow.pop %v847
    %v849 = vadd.f32 %v848, 1.0
    %v850 = vrcp.pop %v849
    %v851 = vmul.f32 %v849, %v850
    %v852 = vsub.f32 1.0, %v851
    %v853 = vmul.f32 %v850, %v852
    %v854 = vadd.f32 %v850, %v853
    %vm855 = vweird.f32 %v849
    %vm856 = vweird.f32 %v850
    %vm857 = vmor %vm855, %vm856
    %v858 = vsel %vm857, %v850, %v854
    %v859 = vand.u32 2147483647, %v849
    %vm860 = vcmp.eq.f32.partialorder %v859, 8.507059e+37
    %v861 = vand.u32 %v849, 2147483648
    %v862 = vor.u32 1.1754944e-38, %v861
    %v863 = vsel %vm860, %v862, %v858
    %v864 = vmul.f32 1.0, %v863
    %v865 = vmul.f32 %v844, %v712
    %v866 = vmul.f32 %v825, %v845
    %v867 = vadd.f32 %v865, %v866
    %v868 = vtanh.pop %v867
    %v869 = vmul.f32 %v864, %v868
    %s870 = scalar_lea.vmem [#allocation6], 16
    %v871 = vld [vmem:[%s870] sm:$0xff]
    %v872 = vmul.f32 %v871, %v869
    %v873 = vadd.f32 %v718, %v872
    %v874 = vld [vmem:[#allocation2 + $0x60] sm:$0xff]
    %v875 = vld [vmem:[#allocation2 + $0x68] sm:$0xff]
    %v876 = vld [vmem:[#allocation2 + $0x70] sm:$0xff]
    %v877 = vld [vmem:[#allocation2 + $0x78] sm:$0xff]
    %878 = vmatpush.msra.mxu0 %v410
    %879 = vmatpush.msra.mxu0 %v406
    %880 = vmatpush.msra.mxu0 %v402
    %881 = vmatpush.msra.mxu0 %v398
    %882 = vmatpush.msra.mxu0 %v394
    %883 = vmatpush.msra.mxu0 %v390
    %884 = vmatpush.msra.mxu0 %v386
    %885 = vmatpush.msra.mxu0 %v382
    %886 = vmatpush.msra.mxu0 %v378
    %887 = vmatpush.msra.mxu0 %v374
    %888 = vmatpush.msra.mxu0 %v370
    %889 = vmatpush.msra.mxu0 %v366
    %890 = vmatpush.msra.mxu0 %v362
    %891 = vmatpush.msra.mxu0 %v358
    %892 = vmatpush.msra.mxu0 %v354
    %893 = vmatpush.msra.mxu0 %v350
    %894 = vmatmul.f32.gmra.mxu0 %v869
    %v895 = vpop.f32.mrf.mxu0
    %v896 = vadd.f32 0.0, %v895
    %897 = vdwg.mxu0
    %898 = vmatpush.msra.mxu0 %v411
    %899 = vmatpush.msra.mxu0 %v407
    %900 = vmatpush.msra.mxu0 %v403
    %901 = vmatpush.msra.mxu0 %v399
    %902 = vmatpush.msra.mxu0 %v395
    %903 = vmatpush.msra.mxu0 %v391
    %904 = vmatpush.msra.mxu0 %v387
    %905 = vmatpush.msra.mxu0 %v383
    %906 = vmatpush.msra.mxu0 %v379
    %907 = vmatpush.msra.mxu0 %v375
    %908 = vmatpush.msra.mxu0 %v371
    %909 = vmatpush.msra.mxu0 %v367
    %910 = vmatpush.msra.mxu0 %v363
    %911 = vmatpush.msra.mxu0 %v359
    %912 = vmatpush.msra.mxu0 %v355
    %913 = vmatpush.msra.mxu0 %v351
    %914 = vmatmul.f32.gmra.mxu0 %v869
    %v915 = vpop.f32.mrf.mxu0
    %v916 = vadd.f32 0.0, %v915
    %917 = vdwg.mxu0
    %918 = vmatpush.msra.mxu0 %v412
    %919 = vmatpush.msra.mxu0 %v408
    %920 = vmatpush.msra.mxu0 %v404
    %921 = vmatpush.msra.mxu0 %v400
    %922 = vmatpush.msra.mxu0 %v396
    %923 = vmatpush.msra.mxu0 %v392
    %924 = vmatpush.msra.mxu0 %v388
    %925 = vmatpush.msra.mxu0 %v384
    %926 = vmatpush.msra.mxu0 %v380
    %927 = vmatpush.msra.mxu0 %v376
    %928 = vmatpush.msra.mxu0 %v372
    %929 = vmatpush.msra.mxu0 %v368
    %930 = vmatpush.msra.mxu0 %v364
    %931 = vmatpush.msra.mxu0 %v360
    %932 = vmatpush.msra.mxu0 %v356
    %933 = vmatpush.msra.mxu0 %v352
    %934 = vmatmul.f32.gmra.mxu0 %v869
    %v935 = vpop.f32.mrf.mxu0
    %v936 = vadd.f32 0.0, %v935
    %937 = vdwg.mxu0
    %938 = vmatpush.msra.mxu0 %v413
    %939 = vmatpush.msra.mxu0 %v409
    %940 = vmatpush.msra.mxu0 %v405
    %941 = vmatpush.msra.mxu0 %v401
    %942 = vmatpush.msra.mxu0 %v397
    %943 = vmatpush.msra.mxu0 %v393
    %944 = vmatpush.msra.mxu0 %v389
    %945 = vmatpush.msra.mxu0 %v385
    %946 = vmatpush.msra.mxu0 %v381
    %947 = vmatpush.msra.mxu0 %v377
    %948 = vmatpush.msra.mxu0 %v373
    %949 = vmatpush.msra.mxu0 %v369
    %950 = vmatpush.msra.mxu0 %v365
    %951 = vmatpush.msra.mxu0 %v361
    %952 = vmatpush.msra.mxu0 %v357
    %953 = vmatpush.msra.mxu0 %v353
    %954 = vmatmul.f32.gmra.mxu0 %v869
    %v955 = vpop.f32.mrf.mxu0
    %v956 = vadd.f32 0.0, %v955
    %957 = vdwg.mxu0
    %v958 = vadd.f32 %v874, %v896
    %v959 = vadd.f32 %v875, %v916
    %v960 = vadd.f32 %v876, %v936
    %v961 = vadd.f32 %v877, %v956
    %v962 = vxor.u32 %v958, 2147483648
    %v963 = vmul.f32 %v962, 1.442695
    %v964 = vpow.pop %v963
    %v965 = vadd.f32 %v964, 1.0
    %v966 = vrcp.pop %v965
    %v967 = vmul.f32 %v965, %v966
    %v968 = vsub.f32 1.0, %v967
    %v969 = vmul.f32 %v966, %v968
    %v970 = vadd.f32 %v966, %v969
    %vm971 = vweird.f32 %v965
    %vm972 = vweird.f32 %v966
    %vm973 = vmor %vm971, %vm972
    %v974 = vsel %vm973, %v966, %v970
    %v975 = vand.u32 2147483647, %v965
    %vm976 = vcmp.eq.f32.partialorder %v975, 8.507059e+37
    %v977 = vand.u32 %v965, 2147483648
    %v978 = vor.u32 1.1754944e-38, %v977
    %v979 = vsel %vm976, %v978, %v974
    %v980 = vmul.f32 1.0, %v979
    %v981 = vxor.u32 %v959, 2147483648
    %v982 = vmul.f32 %v981, 1.442695
    %v983 = vpow.pop %v982
    %v984 = vadd.f32 %v983, 1.0
    %v985 = vrcp.pop %v984
    %v986 = vmul.f32 %v984, %v985
    %v987 = vsub.f32 1.0, %v986
    %v988 = vmul.f32 %v985, %v987
    %v989 = vadd.f32 %v985, %v988
    %vm990 = vweird.f32 %v984
    %vm991 = vweird.f32 %v985
    %vm992 = vmor %vm990, %vm991
    %v993 = vsel %vm992, %v985, %v989
    %v994 = vand.u32 2147483647, %v984
    %vm995 = vcmp.eq.f32.partialorder %v994, 8.507059e+37
    %v996 = vand.u32 %v984, 2147483648
    %v997 = vor.u32 1.1754944e-38, %v996
    %v998 = vsel %vm995, %v997, %v993
    %v999 = vmul.f32 1.0, %v998
    %v1000 = vtanh.pop %v960
    %v1001 = vxor.u32 %v961, 2147483648
    %v1002 = vmul.f32 %v1001, 1.442695
    %v1003 = vpow.pop %v1002
    %v1004 = vadd.f32 %v1003, 1.0
    %v1005 = vrcp.pop %v1004
    %v1006 = vmul.f32 %v1004, %v1005
    %v1007 = vsub.f32 1.0, %v1006
    %v1008 = vmul.f32 %v1005, %v1007
    %v1009 = vadd.f32 %v1005, %v1008
    %vm1010 = vweird.f32 %v1004
    %vm1011 = vweird.f32 %v1005
    %vm1012 = vmor %vm1010, %vm1011
    %v1013 = vsel %vm1012, %v1005, %v1009
    %v1014 = vand.u32 2147483647, %v1004
    %vm1015 = vcmp.eq.f32.partialorder %v1014, 8.507059e+37
    %v1016 = vand.u32 %v1004, 2147483648
    %v1017 = vor.u32 1.1754944e-38, %v1016
    %v1018 = vsel %vm1015, %v1017, %v1013
    %v1019 = vmul.f32 1.0, %v1018
    %v1020 = vmul.f32 %v999, %v867
    %v1021 = vmul.f32 %v980, %v1000
    %v1022 = vadd.f32 %v1020, %v1021
    %v1023 = vtanh.pop %v1022
    %v1024 = vmul.f32 %v1019, %v1023
    %s1025 = scalar_lea.vmem [#allocation6], 24
    %v1026 = vld [vmem:[%s1025] sm:$0xff]
    %v1027 = vmul.f32 %v1026, %v1024
    %v1028 = vadd.f32 %v873, %v1027
    %v1029 = vld [vmem:[#allocation2 + $0x80] sm:$0xff]
    %v1030 = vld [vmem:[#allocation2 + $0x88] sm:$0xff]
    %v1031 = vld [vmem:[#allocation2 + $0x90] sm:$0xff]
    %v1032 = vld [vmem:[#allocation2 + $0x98] sm:$0xff]
    %1033 = vmatpush.msra.mxu0 %v410
    %1034 = vmatpush.msra.mxu0 %v406
    %1035 = vmatpush.msra.mxu0 %v402
    %1036 = vmatpush.msra.mxu0 %v398
    %1037 = vmatpush.msra.mxu0 %v394
    %1038 = vmatpush.msra.mxu0 %v390
    %1039 = vmatpush.msra.mxu0 %v386
    %1040 = vmatpush.msra.mxu0 %v382
    %1041 = vmatpush.msra.mxu0 %v378
    %1042 = vmatpush.msra.mxu0 %v374
    %1043 = vmatpush.msra.mxu0 %v370
    %1044 = vmatpush.msra.mxu0 %v366
    %1045 = vmatpush.msra.mxu0 %v362
    %1046 = vmatpush.msra.mxu0 %v358
    %1047 = vmatpush.msra.mxu0 %v354
    %1048 = vmatpush.msra.mxu0 %v350
    %1049 = vmatmul.f32.gmra.mxu0 %v1024
    %v1050 = vpop.f32.mrf.mxu0
    %v1051 = vadd.f32 0.0, %v1050
    %1052 = vdwg.mxu0
    %1053 = vmatpush.msra.mxu0 %v411
    %1054 = vmatpush.msra.mxu0 %v407
    %1055 = vmatpush.msra.mxu0 %v403
    %1056 = vmatpush.msra.mxu0 %v399
    %1057 = vmatpush.msra.mxu0 %v395
    %1058 = vmatpush.msra.mxu0 %v391
    %1059 = vmatpush.msra.mxu0 %v387
    %1060 = vmatpush.msra.mxu0 %v383
    %1061 = vmatpush.msra.mxu0 %v379
    %1062 = vmatpush.msra.mxu0 %v375
    %1063 = vmatpush.msra.mxu0 %v371
    %1064 = vmatpush.msra.mxu0 %v367
    %1065 = vmatpush.msra.mxu0 %v363
    %1066 = vmatpush.msra.mxu0 %v359
    %1067 = vmatpush.msra.mxu0 %v355
    %1068 = vmatpush.msra.mxu0 %v351
    %1069 = vmatmul.f32.gmra.mxu0 %v1024
    %v1070 = vpop.f32.mrf.mxu0
    %v1071 = vadd.f32 0.0, %v1070
    %1072 = vdwg.mxu0
    %1073 = vmatpush.msra.mxu0 %v412
    %1074 = vmatpush.msra.mxu0 %v408
    %1075 = vmatpush.msra.mxu0 %v404
    %1076 = vmatpush.msra.mxu0 %v400
    %1077 = vmatpush.msra.mxu0 %v396
    %1078 = vmatpush.msra.mxu0 %v392
    %1079 = vmatpush.msra.mxu0 %v388
    %1080 = vmatpush.msra.mxu0 %v384
    %1081 = vmatpush.msra.mxu0 %v380
    %1082 = vmatpush.msra.mxu0 %v376
    %1083 = vmatpush.msra.mxu0 %v372
    %1084 = vmatpush.msra.mxu0 %v368
    %1085 = vmatpush.msra.mxu0 %v364
    %1086 = vmatpush.msra.mxu0 %v360
    %1087 = vmatpush.msra.mxu0 %v356
    %1088 = vmatpush.msra.mxu0 %v352
    %1089 = vmatmul.f32.gmra.mxu0 %v1024
    %v1090 = vpop.f32.mrf.mxu0
    %v1091 = vadd.f32 0.0, %v1090
    %1092 = vdwg.mxu0
    %1093 = vmatpush.msra.mxu0 %v413
    %1094 = vmatpush.msra.mxu0 %v409
    %1095 = vmatpush.msra.mxu0 %v405
    %1096 = vmatpush.msra.mxu0 %v401
    %1097 = vmatpush.msra.mxu0 %v397
    %1098 = vmatpush.msra.mxu0 %v393
    %1099 = vmatpush.msra.mxu0 %v389
    %1100 = vmatpush.msra.mxu0 %v385
    %1101 = vmatpush.msra.mxu0 %v381
    %1102 = vmatpush.msra.mxu0 %v377
    %1103 = vmatpush.msra.mxu0 %v373
    %1104 = vmatpush.msra.mxu0 %v369
    %1105 = vmatpush.msra.mxu0 %v365
    %1106 = vmatpush.msra.mxu0 %v361
    %1107 = vmatpush.msra.mxu0 %v357
    %1108 = vmatpush.msra.mxu0 %v353
    %1109 = vmatmul.f32.gmra.mxu0 %v1024
    %v1110 = vpop.f32.mrf.mxu0
    %v1111 = vadd.f32 0.0, %v1110
    %1112 = vdwg.mxu0
    %v1113 = vadd.f32 %v1029, %v1051
    %v1114 = vadd.f32 %v1030, %v1071
    %v1115 = vadd.f32 %v1031, %v1091
    %v1116 = vadd.f32 %v1032, %v1111
    %v1117 = vxor.u32 %v1113, 2147483648
    %v1118 = vmul.f32 %v1117, 1.442695
    %v1119 = vpow.pop %v1118
    %v1120 = vadd.f32 %v1119, 1.0
    %v1121 = vrcp.pop %v1120
    %v1122 = vmul.f32 %v1120, %v1121
    %v1123 = vsub.f32 1.0, %v1122
    %v1124 = vmul.f32 %v1121, %v1123
    %v1125 = vadd.f32 %v1121, %v1124
    %vm1126 = vweird.f32 %v1120
    %vm1127 = vweird.f32 %v1121
    %vm1128 = vmor %vm1126, %vm1127
    %v1129 = vsel %vm1128, %v1121, %v1125
    %v1130 = vand.u32 2147483647, %v1120
    %vm1131 = vcmp.eq.f32.partialorder %v1130, 8.507059e+37
    %v1132 = vand.u32 %v1120, 2147483648
    %v1133 = vor.u32 1.1754944e-38, %v1132
    %v1134 = vsel %vm1131, %v1133, %v1129
    %v1135 = vmul.f32 1.0, %v1134
    %v1136 = vxor.u32 %v1114, 2147483648
    %v1137 = vmul.f32 %v1136, 1.442695
    %v1138 = vpow.pop %v1137
    %v1139 = vadd.f32 %v1138, 1.0
    %v1140 = vrcp.pop %v1139
    %v1141 = vmul.f32 %v1139, %v1140
    %v1142 = vsub.f32 1.0, %v1141
    %v1143 = vmul.f32 %v1140, %v1142
    %v1144 = vadd.f32 %v1140, %v1143
    %vm1145 = vweird.f32 %v1139
    %vm1146 = vweird.f32 %v1140
    %vm1147 = vmor %vm1145, %vm1146
    %v1148 = vsel %vm1147, %v1140, %v1144
    %v1149 = vand.u32 2147483647, %v1139
    %vm1150 = vcmp.eq.f32.partialorder %v1149, 8.507059e+37
    %v1151 = vand.u32 %v1139, 2147483648
    %v1152 = vor.u32 1.1754944e-38, %v1151
    %v1153 = vsel %vm1150, %v1152, %v1148
    %v1154 = vmul.f32 1.0, %v1153
    %v1155 = vtanh.pop %v1115
    %v1156 = vxor.u32 %v1116, 2147483648
    %v1157 = vmul.f32 %v1156, 1.442695
    %v1158 = vpow.pop %v1157
    %v1159 = vadd.f32 %v1158, 1.0
    %v1160 = vrcp.pop %v1159
    %v1161 = vmul.f32 %v1159, %v1160
    %v1162 = vsub.f32 1.0, %v1161
    %v1163 = vmul.f32 %v1160, %v1162
    %v1164 = vadd.f32 %v1160, %v1163
    %vm1165 = vweird.f32 %v1159
    %vm1166 = vweird.f32 %v1160
    %vm1167 = vmor %vm1165, %vm1166
    %v1168 = vsel %vm1167, %v1160, %v1164
    %v1169 = vand.u32 2147483647, %v1159
    %vm1170 = vcmp.eq.f32.partialorder %v1169, 8.507059e+37
    %v1171 = vand.u32 %v1159, 2147483648
    %v1172 = vor.u32 1.1754944e-38, %v1171
    %v1173 = vsel %vm1170, %v1172, %v1168
    %v1174 = vmul.f32 1.0, %v1173
    %v1175 = vmul.f32 %v1154, %v1022
    %v1176 = vmul.f32 %v1135, %v1155
    %v1177 = vadd.f32 %v1175, %v1176
    %v1178 = vtanh.pop %v1177
    %v1179 = vmul.f32 %v1174, %v1178
    %s1180 = scalar_lea.vmem [#allocation6], 32
    %v1181 = vld [vmem:[%s1180] sm:$0xff]
    %v1182 = vmul.f32 %v1181, %v1179
    %v1183 = vadd.f32 %v1028, %v1182
    %v1184 = vld [vmem:[#allocation2 + $0xa0] sm:$0xff]
    %v1185 = vld [vmem:[#allocation2 + $0xa8] sm:$0xff]
    %v1186 = vld [vmem:[#allocation2 + $0xb0] sm:$0xff]
    %v1187 = vld [vmem:[#allocation2 + $0xb8] sm:$0xff]
    %1188 = vmatpush.msra.mxu0 %v410
    %1189 = vmatpush.msra.mxu0 %v406
    %1190 = vmatpush.msra.mxu0 %v402
    %1191 = vmatpush.msra.mxu0 %v398
    %1192 = vmatpush.msra.mxu0 %v394
    %1193 = vmatpush.msra.mxu0 %v390
    %1194 = vmatpush.msra.mxu0 %v386
    %1195 = vmatpush.msra.mxu0 %v382
    %1196 = vmatpush.msra.mxu0 %v378
    %1197 = vmatpush.msra.mxu0 %v374
    %1198 = vmatpush.msra.mxu0 %v370
    %1199 = vmatpush.msra.mxu0 %v366
    %1200 = vmatpush.msra.mxu0 %v362
    %1201 = vmatpush.msra.mxu0 %v358
    %1202 = vmatpush.msra.mxu0 %v354
    %1203 = vmatpush.msra.mxu0 %v350
    %1204 = vmatmul.f32.gmra.mxu0 %v1179
    %v1205 = vpop.f32.mrf.mxu0
    %v1206 = vadd.f32 0.0, %v1205
    %1207 = vdwg.mxu0
    %1208 = vmatpush.msra.mxu0 %v411
    %1209 = vmatpush.msra.mxu0 %v407
    %1210 = vmatpush.msra.mxu0 %v403
    %1211 = vmatpush.msra.mxu0 %v399
    %1212 = vmatpush.msra.mxu0 %v395
    %1213 = vmatpush.msra.mxu0 %v391
    %1214 = vmatpush.msra.mxu0 %v387
    %1215 = vmatpush.msra.mxu0 %v383
    %1216 = vmatpush.msra.mxu0 %v379
    %1217 = vmatpush.msra.mxu0 %v375
    %1218 = vmatpush.msra.mxu0 %v371
    %1219 = vmatpush.msra.mxu0 %v367
    %1220 = vmatpush.msra.mxu0 %v363
    %1221 = vmatpush.msra.mxu0 %v359
    %1222 = vmatpush.msra.mxu0 %v355
    %1223 = vmatpush.msra.mxu0 %v351
    %1224 = vmatmul.f32.gmra.mxu0 %v1179
    %v1225 = vpop.f32.mrf.mxu0
    %v1226 = vadd.f32 0.0, %v1225
    %1227 = vdwg.mxu0
    %1228 = vmatpush.msra.mxu0 %v412
    %1229 = vmatpush.msra.mxu0 %v408
    %1230 = vmatpush.msra.mxu0 %v404
    %1231 = vmatpush.msra.mxu0 %v400
    %1232 = vmatpush.msra.mxu0 %v396
    %1233 = vmatpush.msra.mxu0 %v392
    %1234 = vmatpush.msra.mxu0 %v388
    %1235 = vmatpush.msra.mxu0 %v384
    %1236 = vmatpush.msra.mxu0 %v380
    %1237 = vmatpush.msra.mxu0 %v376
    %1238 = vmatpush.msra.mxu0 %v372
    %1239 = vmatpush.msra.mxu0 %v368
    %1240 = vmatpush.msra.mxu0 %v364
    %1241 = vmatpush.msra.mxu0 %v360
    %1242 = vmatpush.msra.mxu0 %v356
    %1243 = vmatpush.msra.mxu0 %v352
    %1244 = vmatmul.f32.gmra.mxu0 %v1179
    %v1245 = vpop.f32.mrf.mxu0
    %v1246 = vadd.f32 0.0, %v1245
    %1247 = vdwg.mxu0
    %1248 = vmatpush.msra.mxu0 %v413
    %1249 = vmatpush.msra.mxu0 %v409
    %1250 = vmatpush.msra.mxu0 %v405
    %1251 = vmatpush.msra.mxu0 %v401
    %1252 = vmatpush.msra.mxu0 %v397
    %1253 = vmatpush.msra.mxu0 %v393
    %1254 = vmatpush.msra.mxu0 %v389
    %1255 = vmatpush.msra.mxu0 %v385
    %1256 = vmatpush.msra.mxu0 %v381
    %1257 = vmatpush.msra.mxu0 %v377
    %1258 = vmatpush.msra.mxu0 %v373
    %1259 = vmatpush.msra.mxu0 %v369
    %1260 = vmatpush.msra.mxu0 %v365
    %1261 = vmatpush.msra.mxu0 %v361
    %1262 = vmatpush.msra.mxu0 %v357
    %1263 = vmatpush.msra.mxu0 %v353
    %1264 = vmatmul.f32.gmra.mxu0 %v1179
    %v1265 = vpop.f32.mrf.mxu0
    %v1266 = vadd.f32 0.0, %v1265
    %1267 = vdwg.mxu0
    %v1268 = vadd.f32 %v1184, %v1206
    %v1269 = vadd.f32 %v1185, %v1226
    %v1270 = vadd.f32 %v1186, %v1246
    %v1271 = vadd.f32 %v1187, %v1266
    %v1272 = vxor.u32 %v1268, 2147483648
    %v1273 = vmul.f32 %v1272, 1.442695
    %v1274 = vpow.pop %v1273
    %v1275 = vadd.f32 %v1274, 1.0
    %v1276 = vrcp.pop %v1275
    %v1277 = vmul.f32 %v1275, %v1276
    %v1278 = vsub.f32 1.0, %v1277
    %v1279 = vmul.f32 %v1276, %v1278
    %v1280 = vadd.f32 %v1276, %v1279
    %vm1281 = vweird.f32 %v1275
    %vm1282 = vweird.f32 %v1276
    %vm1283 = vmor %vm1281, %vm1282
    %v1284 = vsel %vm1283, %v1276, %v1280
    %v1285 = vand.u32 2147483647, %v1275
    %vm1286 = vcmp.eq.f32.partialorder %v1285, 8.507059e+37
    %v1287 = vand.u32 %v1275, 2147483648
    %v1288 = vor.u32 1.1754944e-38, %v1287
    %v1289 = vsel %vm1286, %v1288, %v1284
    %v1290 = vmul.f32 1.0, %v1289
    %v1291 = vxor.u32 %v1269, 2147483648
    %v1292 = vmul.f32 %v1291, 1.442695
    %v1293 = vpow.pop %v1292
    %v1294 = vadd.f32 %v1293, 1.0
    %v1295 = vrcp.pop %v1294
    %v1296 = vmul.f32 %v1294, %v1295
    %v1297 = vsub.f32 1.0, %v1296
    %v1298 = vmul.f32 %v1295, %v1297
    %v1299 = vadd.f32 %v1295, %v1298
    %vm1300 = vweird.f32 %v1294
    %vm1301 = vweird.f32 %v1295
    %vm1302 = vmor %vm1300, %vm1301
    %v1303 = vsel %vm1302, %v1295, %v1299
    %v1304 = vand.u32 2147483647, %v1294
    %vm1305 = vcmp.eq.f32.partialorder %v1304, 8.507059e+37
    %v1306 = vand.u32 %v1294, 2147483648
    %v1307 = vor.u32 1.1754944e-38, %v1306
    %v1308 = vsel %vm1305, %v1307, %v1303
    %v1309 = vmul.f32 1.0, %v1308
    %v1310 = vtanh.pop %v1270
    %v1311 = vxor.u32 %v1271, 2147483648
    %v1312 = vmul.f32 %v1311, 1.442695
    %v1313 = vpow.pop %v1312
    %v1314 = vadd.f32 %v1313, 1.0
    %v1315 = vrcp.pop %v1314
    %v1316 = vmul.f32 %v1314, %v1315
    %v1317 = vsub.f32 1.0, %v1316
    %v1318 = vmul.f32 %v1315, %v1317
    %v1319 = vadd.f32 %v1315, %v1318
    %vm1320 = vweird.f32 %v1314
    %vm1321 = vweird.f32 %v1315
    %vm1322 = vmor %vm1320, %vm1321
    %v1323 = vsel %vm1322, %v1315, %v1319
    %v1324 = vand.u32 2147483647, %v1314
    %vm1325 = vcmp.eq.f32.partialorder %v1324, 8.507059e+37
    %v1326 = vand.u32 %v1314, 2147483648
    %v1327 = vor.u32 1.1754944e-38, %v1326
    %v1328 = vsel %vm1325, %v1327, %v1323
    %v1329 = vmul.f32 1.0, %v1328
    %v1330 = vmul.f32 %v1309, %v1177
    %v1331 = vmul.f32 %v1290, %v1310
    %v1332 = vadd.f32 %v1330, %v1331
    %v1333 = vtanh.pop %v1332
    %v1334 = vmul.f32 %v1329, %v1333
    %s1335 = scalar_lea.vmem [#allocation6], 40
    %v1336 = vld [vmem:[%s1335] sm:$0xff]
    %v1337 = vmul.f32 %v1336, %v1334
    %v1338 = vadd.f32 %v1183, %v1337
    %v1339 = vld [vmem:[#allocation2 + $0xc0] sm:$0xff]
    %v1340 = vld [vmem:[#allocation2 + $0xc8] sm:$0xff]
    %v1341 = vld [vmem:[#allocation2 + $0xd0] sm:$0xff]
    %v1342 = vld [vmem:[#allocation2 + $0xd8] sm:$0xff]
    %1343 = vmatpush.msra.mxu0 %v410
    %1344 = vmatpush.msra.mxu0 %v406
    %1345 = vmatpush.msra.mxu0 %v402
    %1346 = vmatpush.msra.mxu0 %v398
    %1347 = vmatpush.msra.mxu0 %v394
    %1348 = vmatpush.msra.mxu0 %v390
    %1349 = vmatpush.msra.mxu0 %v386
    %1350 = vmatpush.msra.mxu0 %v382
    %1351 = vmatpush.msra.mxu0 %v378
    %1352 = vmatpush.msra.mxu0 %v374
    %1353 = vmatpush.msra.mxu0 %v370
    %1354 = vmatpush.msra.mxu0 %v366
    %1355 = vmatpush.msra.mxu0 %v362
    %1356 = vmatpush.msra.mxu0 %v358
    %1357 = vmatpush.msra.mxu0 %v354
    %1358 = vmatpush.msra.mxu0 %v350
    %1359 = vmatmul.f32.gmra.mxu0 %v1334
    %v1360 = vpop.f32.mrf.mxu0
    %v1361 = vadd.f32 0.0, %v1360
    %1362 = vdwg.mxu0
    %1363 = vmatpush.msra.mxu0 %v411
    %1364 = vmatpush.msra.mxu0 %v407
    %1365 = vmatpush.msra.mxu0 %v403
    %1366 = vmatpush.msra.mxu0 %v399
    %1367 = vmatpush.msra.mxu0 %v395
    %1368 = vmatpush.msra.mxu0 %v391
    %1369 = vmatpush.msra.mxu0 %v387
    %1370 = vmatpush.msra.mxu0 %v383
    %1371 = vmatpush.msra.mxu0 %v379
    %1372 = vmatpush.msra.mxu0 %v375
    %1373 = vmatpush.msra.mxu0 %v371
    %1374 = vmatpush.msra.mxu0 %v367
    %1375 = vmatpush.msra.mxu0 %v363
    %1376 = vmatpush.msra.mxu0 %v359
    %1377 = vmatpush.msra.mxu0 %v355
    %1378 = vmatpush.msra.mxu0 %v351
    %1379 = vmatmul.f32.gmra.mxu0 %v1334
    %v1380 = vpop.f32.mrf.mxu0
    %v1381 = vadd.f32 0.0, %v1380
    %1382 = vdwg.mxu0
    %1383 = vmatpush.msra.mxu0 %v412
    %1384 = vmatpush.msra.mxu0 %v408
    %1385 = vmatpush.msra.mxu0 %v404
    %1386 = vmatpush.msra.mxu0 %v400
    %1387 = vmatpush.msra.mxu0 %v396
    %1388 = vmatpush.msra.mxu0 %v392
    %1389 = vmatpush.msra.mxu0 %v388
    %1390 = vmatpush.msra.mxu0 %v384
    %1391 = vmatpush.msra.mxu0 %v380
    %1392 = vmatpush.msra.mxu0 %v376
    %1393 = vmatpush.msra.mxu0 %v372
    %1394 = vmatpush.msra.mxu0 %v368
    %1395 = vmatpush.msra.mxu0 %v364
    %1396 = vmatpush.msra.mxu0 %v360
    %1397 = vmatpush.msra.mxu0 %v356
    %1398 = vmatpush.msra.mxu0 %v352
    %1399 = vmatmul.f32.gmra.mxu0 %v1334
    %v1400 = vpop.f32.mrf.mxu0
    %v1401 = vadd.f32 0.0, %v1400
    %1402 = vdwg.mxu0
    %1403 = vmatpush.msra.mxu0 %v413
    %1404 = vmatpush.msra.mxu0 %v409
    %1405 = vmatpush.msra.mxu0 %v405
    %1406 = vmatpush.msra.mxu0 %v401
    %1407 = vmatpush.msra.mxu0 %v397
    %1408 = vmatpush.msra.mxu0 %v393
    %1409 = vmatpush.msra.mxu0 %v389
    %1410 = vmatpush.msra.mxu0 %v385
    %1411 = vmatpush.msra.mxu0 %v381
    %1412 = vmatpush.msra.mxu0 %v377
    %1413 = vmatpush.msra.mxu0 %v373
    %1414 = vmatpush.msra.mxu0 %v369
    %1415 = vmatpush.msra.mxu0 %v365
    %1416 = vmatpush.msra.mxu0 %v361
    %1417 = vmatpush.msra.mxu0 %v357
    %1418 = vmatpush.msra.mxu0 %v353
    %1419 = vmatmul.f32.gmra.mxu0 %v1334
    %v1420 = vpop.f32.mrf.mxu0
    %v1421 = vadd.f32 0.0, %v1420
    %1422 = vdwg.mxu0
    %v1423 = vadd.f32 %v1339, %v1361
    %v1424 = vadd.f32 %v1340, %v1381
    %v1425 = vadd.f32 %v1341, %v1401
    %v1426 = vadd.f32 %v1342, %v1421
    %v1427 = vxor.u32 %v1423, 2147483648
    %v1428 = vmul.f32 %v1427, 1.442695
    %v1429 = vpow.pop %v1428
    %v1430 = vadd.f32 %v1429, 1.0
    %v1431 = vrcp.pop %v1430
    %v1432 = vmul.f32 %v1430, %v1431
    %v1433 = vsub.f32 1.0, %v1432
    %v1434 = vmul.f32 %v1431, %v1433
    %v1435 = vadd.f32 %v1431, %v1434
    %vm1436 = vweird.f32 %v1430
    %vm1437 = vweird.f32 %v1431
    %vm1438 = vmor %vm1436, %vm1437
    %v1439 = vsel %vm1438, %v1431, %v1435
    %v1440 = vand.u32 2147483647, %v1430
    %vm1441 = vcmp.eq.f32.partialorder %v1440, 8.507059e+37
    %v1442 = vand.u32 %v1430, 2147483648
    %v1443 = vor.u32 1.1754944e-38, %v1442
    %v1444 = vsel %vm1441, %v1443, %v1439
    %v1445 = vmul.f32 1.0, %v1444
    %v1446 = vxor.u32 %v1424, 2147483648
    %v1447 = vmul.f32 %v1446, 1.442695
    %v1448 = vpow.pop %v1447
    %v1449 = vadd.f32 %v1448, 1.0
    %v1450 = vrcp.pop %v1449
    %v1451 = vmul.f32 %v1449, %v1450
    %v1452 = vsub.f32 1.0, %v1451
    %v1453 = vmul.f32 %v1450, %v1452
    %v1454 = vadd.f32 %v1450, %v1453
    %vm1455 = vweird.f32 %v1449
    %vm1456 = vweird.f32 %v1450
    %vm1457 = vmor %vm1455, %vm1456
    %v1458 = vsel %vm1457, %v1450, %v1454
    %v1459 = vand.u32 2147483647, %v1449
    %vm1460 = vcmp.eq.f32.partialorder %v1459, 8.507059e+37
    %v1461 = vand.u32 %v1449, 2147483648
    %v1462 = vor.u32 1.1754944e-38, %v1461
    %v1463 = vsel %vm1460, %v1462, %v1458
    %v1464 = vmul.f32 1.0, %v1463
    %v1465 = vtanh.pop %v1425
    %v1466 = vxor.u32 %v1426, 2147483648
    %v1467 = vmul.f32 %v1466, 1.442695
    %v1468 = vpow.pop %v1467
    %v1469 = vadd.f32 %v1468, 1.0
    %v1470 = vrcp.pop %v1469
    %v1471 = vmul.f32 %v1469, %v1470
    %v1472 = vsub.f32 1.0, %v1471
    %v1473 = vmul.f32 %v1470, %v1472
    %v1474 = vadd.f32 %v1470, %v1473
    %vm1475 = vweird.f32 %v1469
    %vm1476 = vweird.f32 %v1470
    %vm1477 = vmor %vm1475, %vm1476
    %v1478 = vsel %vm1477, %v1470, %v1474
    %v1479 = vand.u32 2147483647, %v1469
    %vm1480 = vcmp.eq.f32.partialorder %v1479, 8.507059e+37
    %v1481 = vand.u32 %v1469, 2147483648
    %v1482 = vor.u32 1.1754944e-38, %v1481
    %v1483 = vsel %vm1480, %v1482, %v1478
    %v1484 = vmul.f32 1.0, %v1483
    %v1485 = vmul.f32 %v1464, %v1332
    %v1486 = vmul.f32 %v1445, %v1465
    %v1487 = vadd.f32 %v1485, %v1486
    %v1488 = vtanh.pop %v1487
    %v1489 = vmul.f32 %v1484, %v1488
    %s1490 = scalar_lea.vmem [#allocation6], 48
    %v1491 = vld [vmem:[%s1490] sm:$0xff]
    %v1492 = vmul.f32 %v1491, %v1489
    %v1493 = vadd.f32 %v1338, %v1492
    %v1494 = vld [vmem:[#allocation2 + $0xe0] sm:$0xff]
    %v1495 = vld [vmem:[#allocation2 + $0xe8] sm:$0xff]
    %v1496 = vld [vmem:[#allocation2 + $0xf0] sm:$0xff]
    %v1497 = vld [vmem:[#allocation2 + $0xf8] sm:$0xff]
    %1498 = vmatpush.msra.mxu0 %v410
    %1499 = vmatpush.msra.mxu0 %v406
    %1500 = vmatpush.msra.mxu0 %v402
    %1501 = vmatpush.msra.mxu0 %v398
    %1502 = vmatpush.msra.mxu0 %v394
    %1503 = vmatpush.msra.mxu0 %v390
    %1504 = vmatpush.msra.mxu0 %v386
    %1505 = vmatpush.msra.mxu0 %v382
    %1506 = vmatpush.msra.mxu0 %v378
    %1507 = vmatpush.msra.mxu0 %v374
    %1508 = vmatpush.msra.mxu0 %v370
    %1509 = vmatpush.msra.mxu0 %v366
    %1510 = vmatpush.msra.mxu0 %v362
    %1511 = vmatpush.msra.mxu0 %v358
    %1512 = vmatpush.msra.mxu0 %v354
    %1513 = vmatpush.msra.mxu0 %v350
    %1514 = vmatmul.f32.gmra.mxu0 %v1489
    %v1515 = vpop.f32.mrf.mxu0
    %v1516 = vadd.f32 0.0, %v1515
    %1517 = vdwg.mxu0
    %1518 = vmatpush.msra.mxu0 %v411
    %1519 = vmatpush.msra.mxu0 %v407
    %1520 = vmatpush.msra.mxu0 %v403
    %1521 = vmatpush.msra.mxu0 %v399
    %1522 = vmatpush.msra.mxu0 %v395
    %1523 = vmatpush.msra.mxu0 %v391
    %1524 = vmatpush.msra.mxu0 %v387
    %1525 = vmatpush.msra.mxu0 %v383
    %1526 = vmatpush.msra.mxu0 %v379
    %1527 = vmatpush.msra.mxu0 %v375
    %1528 = vmatpush.msra.mxu0 %v371
    %1529 = vmatpush.msra.mxu0 %v367
    %1530 = vmatpush.msra.mxu0 %v363
    %1531 = vmatpush.msra.mxu0 %v359
    %1532 = vmatpush.msra.mxu0 %v355
    %1533 = vmatpush.msra.mxu0 %v351
    %1534 = vmatmul.f32.gmra.mxu0 %v1489
    %v1535 = vpop.f32.mrf.mxu0
    %v1536 = vadd.f32 0.0, %v1535
    %1537 = vdwg.mxu0
    %1538 = vmatpush.msra.mxu0 %v412
    %1539 = vmatpush.msra.mxu0 %v408
    %1540 = vmatpush.msra.mxu0 %v404
    %1541 = vmatpush.msra.mxu0 %v400
    %1542 = vmatpush.msra.mxu0 %v396
    %1543 = vmatpush.msra.mxu0 %v392
    %1544 = vmatpush.msra.mxu0 %v388
    %1545 = vmatpush.msra.mxu0 %v384
    %1546 = vmatpush.msra.mxu0 %v380
    %1547 = vmatpush.msra.mxu0 %v376
    %1548 = vmatpush.msra.mxu0 %v372
    %1549 = vmatpush.msra.mxu0 %v368
    %1550 = vmatpush.msra.mxu0 %v364
    %1551 = vmatpush.msra.mxu0 %v360
    %1552 = vmatpush.msra.mxu0 %v356
    %1553 = vmatpush.msra.mxu0 %v352
    %1554 = vmatmul.f32.gmra.mxu0 %v1489
    %v1555 = vpop.f32.mrf.mxu0
    %v1556 = vadd.f32 0.0, %v1555
    %1557 = vdwg.mxu0
    %1558 = vmatpush.msra.mxu0 %v413
    %1559 = vmatpush.msra.mxu0 %v409
    %1560 = vmatpush.msra.mxu0 %v405
    %1561 = vmatpush.msra.mxu0 %v401
    %1562 = vmatpush.msra.mxu0 %v397
    %1563 = vmatpush.msra.mxu0 %v393
    %1564 = vmatpush.msra.mxu0 %v389
    %1565 = vmatpush.msra.mxu0 %v385
    %1566 = vmatpush.msra.mxu0 %v381
    %1567 = vmatpush.msra.mxu0 %v377
    %1568 = vmatpush.msra.mxu0 %v373
    %1569 = vmatpush.msra.mxu0 %v369
    %1570 = vmatpush.msra.mxu0 %v365
    %1571 = vmatpush.msra.mxu0 %v361
    %1572 = vmatpush.msra.mxu0 %v357
    %1573 = vmatpush.msra.mxu0 %v353
    %1574 = vmatmul.f32.gmra.mxu0 %v1489
    %v1575 = vpop.f32.mrf.mxu0
    %v1576 = vadd.f32 0.0, %v1575
    %1577 = vdwg.mxu0
    %v1578 = vadd.f32 %v1494, %v1516
    %v1579 = vadd.f32 %v1495, %v1536
    %v1580 = vadd.f32 %v1496, %v1556
    %v1581 = vadd.f32 %v1497, %v1576
    %v1582 = vxor.u32 %v1578, 2147483648
    %v1583 = vmul.f32 %v1582, 1.442695
    %v1584 = vpow.pop %v1583
    %v1585 = vadd.f32 %v1584, 1.0
    %v1586 = vrcp.pop %v1585
    %v1587 = vmul.f32 %v1585, %v1586
    %v1588 = vsub.f32 1.0, %v1587
    %v1589 = vmul.f32 %v1586, %v1588
    %v1590 = vadd.f32 %v1586, %v1589
    %vm1591 = vweird.f32 %v1585
    %vm1592 = vweird.f32 %v1586
    %vm1593 = vmor %vm1591, %vm1592
    %v1594 = vsel %vm1593, %v1586, %v1590
    %v1595 = vand.u32 2147483647, %v1585
    %vm1596 = vcmp.eq.f32.partialorder %v1595, 8.507059e+37
    %v1597 = vand.u32 %v1585, 2147483648
    %v1598 = vor.u32 1.1754944e-38, %v1597
    %v1599 = vsel %vm1596, %v1598, %v1594
    %v1600 = vmul.f32 1.0, %v1599
    %v1601 = vxor.u32 %v1579, 2147483648
    %v1602 = vmul.f32 %v1601, 1.442695
    %v1603 = vpow.pop %v1602
    %v1604 = vadd.f32 %v1603, 1.0
    %v1605 = vrcp.pop %v1604
    %v1606 = vmul.f32 %v1604, %v1605
    %v1607 = vsub.f32 1.0, %v1606
    %v1608 = vmul.f32 %v1605, %v1607
    %v1609 = vadd.f32 %v1605, %v1608
    %vm1610 = vweird.f32 %v1604
    %vm1611 = vweird.f32 %v1605
    %vm1612 = vmor %vm1610, %vm1611
    %v1613 = vsel %vm1612, %v1605, %v1609
    %v1614 = vand.u32 2147483647, %v1604
    %vm1615 = vcmp.eq.f32.partialorder %v1614, 8.507059e+37
    %v1616 = vand.u32 %v1604, 2147483648
    %v1617 = vor.u32 1.1754944e-38, %v1616
    %v1618 = vsel %vm1615, %v1617, %v1613
    %v1619 = vmul.f32 1.0, %v1618
    %v1620 = vtanh.pop %v1580
    %v1621 = vxor.u32 %v1581, 2147483648
    %v1622 = vmul.f32 %v1621, 1.442695
    %v1623 = vpow.pop %v1622
    %v1624 = vadd.f32 %v1623, 1.0
    %v1625 = vrcp.pop %v1624
    %v1626 = vmul.f32 %v1624, %v1625
    %v1627 = vsub.f32 1.0, %v1626
    %v1628 = vmul.f32 %v1625, %v1627
    %v1629 = vadd.f32 %v1625, %v1628
    %vm1630 = vweird.f32 %v1624
    %vm1631 = vweird.f32 %v1625
    %vm1632 = vmor %vm1630, %vm1631
    %v1633 = vsel %vm1632, %v1625, %v1629
    %v1634 = vand.u32 2147483647, %v1624
    %vm1635 = vcmp.eq.f32.partialorder %v1634, 8.507059e+37
    %v1636 = vand.u32 %v1624, 2147483648
    %v1637 = vor.u32 1.1754944e-38, %v1636
    %v1638 = vsel %vm1635, %v1637, %v1633
    %v1639 = vmul.f32 1.0, %v1638
    %v1640 = vmul.f32 %v1619, %v1487
    %v1641 = vmul.f32 %v1600, %v1620
    %v1642 = vadd.f32 %v1640, %v1641
    %v1643 = vtanh.pop %v1642
    %v1644 = vmul.f32 %v1639, %v1643
    %s1645 = scalar_lea.vmem [#allocation6], 56
    %v1646 = vld [vmem:[%s1645] sm:$0xff]
    %v1647 = vmul.f32 %v1646, %v1644
    %v1648 = vadd.f32 %v1493, %v1647
    %v1649 = vld [vmem:[%s5] sm:$0x1]
    %v1651 = vperm.slane %v1649, 0
    %v1653 = vmul.f32 %v1648, %v1651
    %1654 = vadd.xlane.f32.xlu0 %v1653
    %v1655 = vpop.xlane.xlu0 %1654
    %v1656 = vld [vmem:[#allocation3] sm:$0x1]
    %v1658 = vperm.slane %v1656, 0
    %v1660 = vadd.f32 %v1655, %v1658
    %v1661 = vxor.u32 %v1660, 2147483648
    %v1662 = vmul.f32 %v1661, 1.442695
    %v1663 = vpow.pop %v1662
    %v1664 = vadd.f32 %v1663, 1.0
    %v1665 = vrcp.pop %v1664
    %v1666 = vmul.f32 %v1664, %v1665
    %v1667 = vsub.f32 1.0, %v1666
    %v1668 = vmul.f32 %v1665, %v1667
    %v1669 = vadd.f32 %v1665, %v1668
    %vm1670 = vweird.f32 %v1664
    %vm1671 = vweird.f32 %v1665
    %vm1672 = vmor %vm1670, %vm1671
    %v1673 = vsel %vm1672, %v1665, %v1669
    %v1674 = vand.u32 2147483647, %v1664
    %vm1675 = vcmp.eq.f32.partialorder %v1674, 8.507059e+37
    %v1676 = vand.u32 %v1664, 2147483648
    %v1677 = vor.u32 1.1754944e-38, %v1676
    %v1678 = vsel %vm1675, %v1677, %v1673
    %v1679 = vmul.f32 1.0, %v1678
    %vm1680 = vcmask 7168
    %1681 = vst.msk [vmem:[%s7] sm:$0xff] %vm1680, %v1679
    // Predicated region
    $region46: #{tpu_custom_call.1} parent=1 // pred_check
      _
    $region47: #{tpu_custom_call.1} parent=1 // pred_check_branch
      %1683 = sbr.rel (0) target = $region49
    $region48: #{tpu_custom_call.1} parent=1 // pred_region
      _
    $region49: #{tpu_custom_call.1} parent=1 // pred_fallthru
      _
    // Predicated region
    $region50: #{tpu_custom_call.1} parent=1 // pred_check
      _
    $region51: #{tpu_custom_call.1} parent=1 // pred_check_branch
      %1685 = sbr.rel (0) target = $region53
    $region52: #{tpu_custom_call.1} parent=1 // pred_region
      _
    $region53: #{tpu_custom_call.1} parent=1 // pred_fallthru
      _
    %1686 = vsyncpa [#allocation5], 1
    %1687 = vsyncpa [#allocation7], 1
    %1688 = vsyncpa [#allocation10], 1

</llo_original>
